<compile_context>
chip_gen: v5e
topology: v5e:2x2
jax: 0.10.0
libtpu: 0.0.40
codegen_flags: <defaults>
</compile_context>

<pallas_src>
import math

import jax
import jax.numpy as jnp
from jax.experimental import pallas as pl
from jax.experimental.pallas import tpu as pltpu

LANE = 128


def _round_up(x, m):
    return ((x + m - 1) // m) * m


def _vmem_capacity_bytes():
    """Generation-aware VMEM size; conservative fallback (v7x) if unavailable."""
    try:
        return int(pltpu.get_tpu_info().vmem_capacity_bytes)
    except Exception:
        return 64 << 20


def _tile_caps(in_f, out_pad, itemsize):
    """Largest row-tile cap whose per-step footprint stays under ~45% of VMEM."""
    budget = int(_vmem_capacity_bytes() * 0.45)
    cap_m = 256
    for t in (1024, 768, 512, 384, 256):
        tk = min(t, 512)
        step = (2 * t * tk * itemsize            # adj tiles (double-buffered)
                + 2 * tk * in_f * itemsize       # x tiles
                + 2 * in_f * out_pad * itemsize  # resident weight
                + 2 * out_pad * 4                # bias
                + 2 * t * out_pad * 4)           # f32 output block
        if step <= budget:
            cap_m = t
            break
    # Contraction tile capped at 512: v5e's MXU is 128-wide, nothing gained past it.
    return cap_m, min(cap_m, 512)


def _largest_divisor(n, cap, mult):
    """Largest t <= cap with t % mult == 0 and n % t == 0, else None."""
    t = min(cap, n)
    t -= t % mult
    while t >= mult:
        if n % t == 0:
            return t
        t -= mult
    return None


def _plan(n, cap_m, cap_k):
    """Choose (n_pad, tm, tk); pad N instead of falling back to full-extent blocks."""
    def pick(nn):
        return (_largest_divisor(nn, cap_m, 8),
                _largest_divisor(nn, cap_k, LANE))

    n_pad = n
    tm, tk = pick(n_pad)
    if tm is None or tk is None:
        n_pad = _round_up(n, 256)     # zero rows/cols are harmless for adj @ support
        tm, tk = pick(n_pad)
    # Keep >= 2 row tiles so v7x megacore can split the "parallel" axis.
    if n_pad // tm == 1 and n_pad >= 16 and (n_pad // 2) % 8 == 0:
        tm = n_pad // 2
    return n_pad, tm, tk


# ------------------------- fused kernel: adj @ (x @ W) + b -------------------------

def _gcn_kernel(adj_ref, x_ref, w_ref, b_ref, out_ref):
    k = pl.program_id(1)

    @pl.when(k == 0)
    def _():
        out_ref[...] = jnp.zeros_like(out_ref)

    # Recompute the projection for this contraction tile: (tk, in_f) @ (in_f, out_pad).
    # W is resident in VMEM (constant index_map), so this costs no extra HBM traffic
    # and removes the support writeback/re-read of a two-kernel pipeline.
    s = jnp.dot(x_ref[...], w_ref[...], preferred_element_type=jnp.float32)

    # Accumulate directly into the resident f32 output block (no scratch).
    out_ref[...] += jnp.dot(adj_ref[...], s.astype(adj_ref.dtype),
                            preferred_element_type=jnp.float32)

    @pl.when(k == pl.num_programs(1) - 1)
    def _():
        out_ref[...] = out_ref[...] + b_ref[...]     # f32 bias epilogue


# ----------------------------------- public API -----------------------------------

def graph_convolution(x, weight, adj, bias=None, *, compute_dtype=jnp.bfloat16):
    """output = adj @ (x @ weight) + bias, returned in float32."""
    n, in_f = x.shape
    assert weight.shape[0] == in_f
    out_f = weight.shape[1]
    assert adj.shape == (n, n)

    # Lane-pad out_features to a multiple of 128 so MXU columns / stores are dense.
    out_pad = _round_up(out_f, LANE)
    itemsize = jnp.dtype(compute_dtype).itemsize

    cap_m, cap_k = _tile_caps(in_f, out_pad, itemsize)
    n_pad, tm, tk = _plan(n, cap_m, cap_k)

    # Operands streamed in compute_dtype (bf16 by default); accumulation stays f32.
    x_c = x.astype(compute_dtype)
    adj_c = adj.astype(compute_dtype)
    w_c = jnp.zeros((in_f, out_pad), compute_dtype).at[:, :out_f].set(
        weight.astype(compute_dtype))
    if bias is None:
        b_pad = jnp.zeros((1, out_pad), jnp.float32)
    else:
        b_pad = jnp.zeros((1, out_pad), jnp.float32).at[0, :out_f].set(
            bias.astype(jnp.float32))

    if n_pad != n:
        x_c = jnp.zeros((n_pad, in_f), compute_dtype).at[:n, :].set(x_c)
        adj_c = jnp.zeros((n_pad, n_pad), compute_dtype).at[:n, :n].set(adj_c)

    # Explicit VMEM limit with headroom, capped below physical capacity.
    step_bytes = (2 * tm * tk * itemsize
                  + 2 * tk * in_f * itemsize
                  + 2 * in_f * out_pad * itemsize
                  + 2 * out_pad * 4
                  + 2 * tm * out_pad * 4)
    vmem_limit = int(min(max(2 * step_bytes, 32 << 20),
                         int(_vmem_capacity_bytes() * 0.9)))

    out_padded = pl.pallas_call(
        _gcn_kernel,
        out_shape=jax.ShapeDtypeStruct((n_pad, out_pad), jnp.float32),
        grid_spec=pltpu.PrefetchScalarGridSpec(
            num_scalar_prefetch=0,
            grid=(n_pad // tm, n_pad // tk),          # reduction axis last
            in_specs=[
                pl.BlockSpec((tm, tk), lambda i, k: (i, k)),         # adj tile
                pl.BlockSpec((tk, in_f), lambda i, k: (k, 0)),       # x tile
                pl.BlockSpec((in_f, out_pad), lambda i, k: (0, 0)),  # W (resident)
                pl.BlockSpec((1, out_pad), lambda i, k: (0, 0)),     # bias (resident)
            ],
            out_specs=pl.BlockSpec((tm, out_pad), lambda i, k: (i, 0)),
        ),
        compiler_params=pltpu.CompilerParams(
            dimension_semantics=("parallel", "arbitrary"),
            vmem_limit_bytes=vmem_limit,
        ),
    )(adj_c, x_c, w_c, b_pad)

    return out_padded[:n, :out_f]


if __name__ == "__main__":
    # Small, TPU-tile-friendly sizes consistent with the module.
    N, in_features, out_features = 512, 64, 32

    key = jax.random.PRNGKey(0)
    k_x, k_adj, k_w, k_b = jax.random.split(key, 4)

    # Deterministic parameter init mirroring reset_parameters():
    # uniform(-stdv, stdv) with stdv = 1/sqrt(out_features).
    stdv = 1.0 / math.sqrt(out_features)
    weight = jax.random.uniform(
        k_w, (in_features, out_features), jnp.float32, minval=-stdv, maxval=stdv)
    bias = jax.random.uniform(
        k_b, (out_features,), jnp.float32, minval=-stdv, maxval=stdv)

    # Inputs: node features and a row-normalized dense adjacency.
    x = jax.random.normal(k_x, (N, in_features), jnp.float32)
    adj_raw = jax.random.uniform(k_adj, (N, N), jnp.float32)
    adj = adj_raw / jnp.sum(adj_raw, axis=1, keepdims=True)

    out = graph_convolution(x, weight, adj, bias)
    out = jax.block_until_ready(out)

    # Pure-JAX f32 reference (same op order: adj @ (x @ W) + b).
    ref = adj @ (x @ weight) + bias
    assert out.shape == (N, out_features)
    # bf16 operand streaming (f32 accumulation) -> slightly looser tolerance vs f32.
    assert jnp.allclose(out, ref, atol=1e-2, rtol=1e-2), "mismatch vs reference"

    print("KERNEL_OK")
</pallas_src>

<mosaic_0001>
module attributes {stable_mosaic.version = 11 : i64} {
  func.func @_gcn_kernel(%arg0: i32, %arg1: i32, %arg2: memref<256x512xbf16, #tpu.memory_space<vmem>>, %arg3: memref<512x64xbf16, #tpu.memory_space<vmem>>, %arg4: memref<64x128xbf16, #tpu.memory_space<vmem>>, %arg5: memref<1x128xf32, #tpu.memory_space<vmem>>, %arg6: memref<256x128xf32, #tpu.memory_space<vmem>>) attributes {dimension_semantics = [#tpu.dimension_semantics<parallel>, #tpu.dimension_semantics<arbitrary>], iteration_bounds = array<i64: 2, 1>, scalar_prefetch = 0 : i64, scratch_operands = 0 : i64, tpu.core_type = #tpu.core_type<tc>, window_params = [{transform_indices = @transform_0, window_bounds = array<i64: 256, 512>}, {transform_indices = @transform_1, window_bounds = array<i64: 512, 64>}, {pipeline_mode = #tpu.pipeline_mode<synchronous>, transform_indices = @transform_2, window_bounds = array<i64: 64, 128>}, {pipeline_mode = #tpu.pipeline_mode<synchronous>, transform_indices = @transform_3, window_bounds = array<i64: 1, 128>}, {transform_indices = @transform_4, window_bounds = array<i64: 256, 128>}]} {
    %c0_i32 = arith.constant 0 : i32
    %0 = arith.cmpi eq, %arg1, %c0_i32 : i32
    %1 = arith.extui %0 : i1 to i32
    %c0_i32_0 = arith.constant 0 : i32
    %2 = arith.cmpi ne, %1, %c0_i32_0 : i32
    scf.if %2 {
      %cst_13 = arith.constant 0.000000e+00 : f32
      %15 = vector.broadcast %cst_13 : f32 to vector<256x128xf32>
      %c0_14 = arith.constant 0 : index
      %c0_15 = arith.constant 0 : index
      %16 = vector.load %arg6[%c0_14, %c0_15] : memref<256x128xf32, #tpu.memory_space<vmem>>, vector<256x128xf32>
      tpu.vector_store %arg6[%c0_14, %c0_15], %15 {strides = array<i32>} : memref<256x128xf32, #tpu.memory_space<vmem>>, vector<256x128xf32>,
    } else {
    }
    %c0 = arith.constant 0 : index
    %c0_1 = arith.constant 0 : index
    %3 = vector.load %arg3[%c0, %c0_1] : memref<512x64xbf16, #tpu.memory_space<vmem>>, vector<512x64xbf16>
    %c0_2 = arith.constant 0 : index
    %c0_3 = arith.constant 0 : index
    %4 = vector.load %arg4[%c0_2, %c0_3] : memref<64x128xbf16, #tpu.memory_space<vmem>>, vector<64x128xbf16>
    %cst = arith.constant dense<0.000000e+00> : vector<512x128xf32>
    %5 = tpu.matmul %3, %4, %cst {dimension_numbers = #tpu.dot_dimension_numbers<[1], [0], [0], [1], [0, 0, 1, 1], [], []>} : vector<512x64xbf16>, vector<64x128xbf16>, vector<512x128xf32> -> vector<512x128xf32>
    %c0_4 = arith.constant 0 : index
    %c0_5 = arith.constant 0 : index
    %6 = vector.load %arg6[%c0_4, %c0_5] : memref<256x128xf32, #tpu.memory_space<vmem>>, vector<256x128xf32>
    %c0_6 = arith.constant 0 : index
    %c0_7 = arith.constant 0 : index
    %7 = vector.load %arg2[%c0_6, %c0_7] : memref<256x512xbf16, #tpu.memory_space<vmem>>, vector<256x512xbf16>
    %8 = arith.truncf %5 : vector<512x128xf32> to vector<512x128xbf16>
    %cst_8 = arith.constant dense<0.000000e+00> : vector<256x128xf32>
    %9 = tpu.matmul %7, %8, %cst_8 {dimension_numbers = #tpu.dot_dimension_numbers<[1], [0], [0], [1], [0, 0, 1, 1], [], []>} : vector<256x512xbf16>, vector<512x128xbf16>, vector<256x128xf32> -> vector<256x128xf32>
    %10 = arith.addf %6, %9 : vector<256x128xf32>
    %c0_9 = arith.constant 0 : index
    %c0_10 = arith.constant 0 : index
    %11 = vector.load %arg6[%c0_9, %c0_10] : memref<256x128xf32, #tpu.memory_space<vmem>>, vector<256x128xf32>
    tpu.vector_store %arg6[%c0_9, %c0_10], %10 {strides = array<i32>} : memref<256x128xf32, #tpu.memory_space<vmem>>, vector<256x128xf32>,
    %c0_i32_11 = arith.constant 0 : i32
    %12 = arith.cmpi eq, %arg1, %c0_i32_11 : i32
    %13 = arith.extui %12 : i1 to i32
    %c0_i32_12 = arith.constant 0 : i32
    %14 = arith.cmpi ne, %13, %c0_i32_12 : i32
    scf.if %14 {
      %c0_13 = arith.constant 0 : index
      %c0_14 = arith.constant 0 : index
      %15 = vector.load %arg6[%c0_13, %c0_14] : memref<256x128xf32, #tpu.memory_space<vmem>>, vector<256x128xf32>
      %c0_15 = arith.constant 0 : index
      %c0_16 = arith.constant 0 : index
      %16 = vector.load %arg5[%c0_15, %c0_16] : memref<1x128xf32, #tpu.memory_space<vmem>>, vector<1x128xf32>
      %17 = vector.broadcast %16 : vector<1x128xf32> to vector<256x128xf32>
      %18 = arith.addf %15, %17 : vector<256x128xf32>
      %c0_17 = arith.constant 0 : index
      %c0_18 = arith.constant 0 : index
      %19 = vector.load %arg6[%c0_17, %c0_18] : memref<256x128xf32, #tpu.memory_space<vmem>>, vector<256x128xf32>
      tpu.vector_store %arg6[%c0_17, %c0_18], %18 {strides = array<i32>} : memref<256x128xf32, #tpu.memory_space<vmem>>, vector<256x128xf32>,
    } else {
    }
    return
  }
  func.func @transform_0(%arg0: i32, %arg1: i32) -> (i32, i32) {
    %c0_i32 = arith.constant 0 : i32
    return %arg0, %arg1 : i32, i32
  }
  func.func @transform_1(%arg0: i32, %arg1: i32) -> (i32, i32) {
    %c0_i32 = arith.constant 0 : i32
    %c0_i32_0 = arith.constant 0 : i32
    return %arg1, %c0_i32 : i32, i32
  }
  func.func @transform_2(%arg0: i32, %arg1: i32) -> (i32, i32) {
    %c0_i32 = arith.constant 0 : i32
    %c0_i32_0 = arith.constant 0 : i32
    %c0_i32_1 = arith.constant 0 : i32
    return %c0_i32, %c0_i32_0 : i32, i32
  }
  func.func @transform_3(%arg0: i32, %arg1: i32) -> (i32, i32) {
    %c0_i32 = arith.constant 0 : i32
    %c0_i32_0 = arith.constant 0 : i32
    %c0_i32_1 = arith.constant 0 : i32
    return %c0_i32, %c0_i32_0 : i32, i32
  }
  func.func @transform_4(%arg0: i32, %arg1: i32) -> (i32, i32) {
    %c0_i32 = arith.constant 0 : i32
    %c0_i32_0 = arith.constant 0 : i32
    return %arg0, %c0_i32 : i32, i32
  }
}

</mosaic_0001>

<llo_original>
// kernel: tpu_custom_call.1
$region0: #{tpu_custom_call.1}
  #allocation0 [shape = 'u32[]', space=smem, size = 0x4, offset = 0x4, fixed_abs, tag = 'smem constant byte address 0x4 - core index']
  #allocation1 [shape = 'u32[72,128]{1,0:T(1,128)}', space=vmem, size = 0x9000, scoped, tag = 'internal scratch']
  %s0 = inlined_call_operand.hbm [shape: bf16[512,512], index: 0, kind: input, shape index: {}]
  %s1 = inlined_call_operand.vmem [shape: bf16[512,64], index: 1, kind: input, shape index: {}]
  %s2 = inlined_call_operand.vmem [shape: bf16[64,128], index: 2, kind: input, shape index: {}]
  %s3 = inlined_call_operand.vmem [shape: f32[1,128], index: 3, kind: input, shape index: {}]
  %s4 = inlined_call_operand.hbm [shape: f32[512,128], index: 4, kind: output, shape index: {}]
  %s5 = sld [smem:[#allocation0]]
  $region61: #{tpu_custom_call.1} parent=0
    _
  %s7 = ssub.s32 1, %s5
  %s8 = scalar_select 0, %s7, %s5
  $region1: #{tpu_custom_call.1} parent=0
    #allocation2 [shape = 'u8[524288]{0}', space=vmem, size = 0x80000, scoped, tag = 'input window, operand 0']
    #allocation3 [shape = 's32[2]{0}', space=sflag, size = 0x8, scoped, tag = 'scoped memory for tpu_custom_call.1']
    #allocation4 [shape = 's32[2]{0}', space=sflag, size = 0x8, scoped, tag = 'scoped memory for tpu_custom_call.1']
    #allocation5 [shape = 'u8[262144]{0}', space=vmem, size = 0x40000, scoped, tag = 'output window, operand 0']
    %9 = vsyncpa [#allocation3], 0
    %s10 = scalar_lea.sflag [#allocation3], 1
    %11 = vsyncpa %s10, 0
    %12 = vsyncpa [#allocation4], 0
    %s13 = scalar_lea.sflag [#allocation4], 1
    %14 = vsyncpa %s13, 0
    loop: start=0, step=1, limit=4
    $region2: #{tpu_custom_call.1} parent=1 // loop_pre_header
      _
    $region3: #{tpu_custom_call.1} parent=1 // loop_header
      %s16 = sphi 0, %s20
      %p17 = scmp.ge.s32.totalorder %s16, 4
      %s23 = sphi 0, %s35
      %s24 = sphi 0, %s31
      %s25 = sphi 0, %s23
      %s26 = sphi 0, %s24
      %s27 = sphi 0, %s25
      %s28 = sphi 0, %s26
      %s40 = sphi 0, %s42
      %s43 = sphi 0, %s40
      %s44 = sphi 0, %s43
      %s60 = sphi 0, %s44
      %s66 = sphi 0, %s68
      %s69 = sphi 0, %s66
      %s70 = sphi 0, %s69
      %s86 = sphi 0, %s70
      %s90 = sphi 0, %s90
      %s92 = sphi 0, %s90
      %s93 = sphi 0, %s92
      %s107 = sphi 0, %s93
      %s111 = sphi 0, %s111
      %s113 = sphi 0, %s111
      %s114 = sphi 0, %s113
      %s128 = sphi 0, %s114
      %s134 = sphi 0, %s136
      %s137 = sphi 0, %s134
      %s138 = sphi 0, %s137
      %s154 = sphi 0, %s138
    $region4: #{tpu_custom_call.1} parent=1 // loop_header_branch
      %19 = sbr.rel (%p17) target = $region8
    $region5: #{tpu_custom_call.1} parent=1 // loop_body
      %s21 = ssub.s32 %s16, 1
      %s22 = ssub.s32 %s16, 2
      %s29 = sadd.s32 1, %s24
      %p30 = scmp.ge.s32.totalorder %s29, 1
      %s31 = scalar_select %p30, 0, %s29
      %s32 = sadd.s32 1, %s23
      %s33 = scalar_select %p30, %s32, %s23
      %p34 = scmp.ge.s32.totalorder %s33, 2
      %s35 = scalar_select %p34, 0, %s33
      %s36 = ssub.s32 %s23, %s35
      %s37 = ssub.s32 %s24, %s31
      %s38 = sor.u32 %s36, %s37
      %p39 = scmp.eq.s32.totalorder %s38, 0
      %s41 = sadd.s32 %s40, 1
      %s42 = scalar_select %p39, %s40, %s41
      %p45 = pneg %p39
      %p46 = scmp.eq.s32.totalorder %s16, 1
      %p47 = por %p45, %p46
      %p48 = scmp.ne.s32.totalorder %s40, %s43
      %p49 = scmp.eq.s32.totalorder %s16, 0
      %p50 = por %p48, %p49
      %p51 = scmp.ne.s32.totalorder %s40, %s43
      %p52 = scmp.eq.s32.totalorder %s21, 1
      %p53 = por %p51, %p52
      %p54 = scmp.ne.s32.totalorder %s43, %s44
      %p55 = scmp.eq.s32.totalorder %s21, 0
      %p56 = por %p54, %p55
      %p57 = scmp.ne.s32.totalorder %s43, %s44
      %p58 = scmp.eq.s32.totalorder %s22, 1
      %p59 = por %p57, %p58
      %p61 = scmp.ne.s32.totalorder %s44, %s60
      %p62 = scmp.eq.s32.totalorder %s22, 0
      %p63 = por %p61, %p62
      %s64 = ssub.s32 %s24, %s31
      %p65 = scmp.eq.s32.totalorder %s64, 0
      %s67 = sadd.s32 %s66, 1
      %s68 = scalar_select %p65, %s66, %s67
      %p71 = pneg %p65
      %p72 = scmp.eq.s32.totalorder %s16, 1
      %p73 = por %p71, %p72
      %p74 = scmp.ne.s32.totalorder %s66, %s69
      %p75 = scmp.eq.s32.totalorder %s16, 0
      %p76 = por %p74, %p75
      %p77 = scmp.ne.s32.totalorder %s66, %s69
      %p78 = scmp.eq.s32.totalorder %s21, 1
      %p79 = por %p77, %p78
      %p80 = scmp.ne.s32.totalorder %s69, %s70
      %p81 = scmp.eq.s32.totalorder %s21, 0
      %p82 = por %p80, %p81
      %p83 = scmp.ne.s32.totalorder %s69, %s70
      %p84 = scmp.eq.s32.totalorder %s22, 1
      %p85 = por %p83, %p84
      %p87 = scmp.ne.s32.totalorder %s70, %s86
      %p88 = scmp.eq.s32.totalorder %s22, 0
      %p89 = por %p87, %p88
      %s91 = sadd.s32 %s90, 1
      %p94 = scmp.eq.s32.totalorder %s16, 1
      %p95 = scmp.ne.s32.totalorder %s90, %s92
      %p96 = scmp.eq.s32.totalorder %s16, 0
      %p97 = por %p95, %p96
      %p98 = scmp.ne.s32.totalorder %s90, %s92
      %p99 = scmp.eq.s32.totalorder %s21, 1
      %p100 = por %p98, %p99
      %p101 = scmp.ne.s32.totalorder %s92, %s93
      %p102 = scmp.eq.s32.totalorder %s21, 0
      %p103 = por %p101, %p102
      %p104 = scmp.ne.s32.totalorder %s92, %s93
      %p105 = scmp.eq.s32.totalorder %s22, 1
      %p106 = por %p104, %p105
      %p108 = scmp.ne.s32.totalorder %s93, %s107
      %p109 = scmp.eq.s32.totalorder %s22, 0
      %p110 = por %p108, %p109
      %s112 = sadd.s32 %s111, 1
      %p115 = scmp.eq.s32.totalorder %s16, 1
      %p116 = scmp.ne.s32.totalorder %s111, %s113
      %p117 = scmp.eq.s32.totalorder %s16, 0
      %p118 = por %p116, %p117
      %p119 = scmp.ne.s32.totalorder %s111, %s113
      %p120 = scmp.eq.s32.totalorder %s21, 1
      %p121 = por %p119, %p120
      %p122 = scmp.ne.s32.totalorder %s113, %s114
      %p123 = scmp.eq.s32.totalorder %s21, 0
      %p124 = por %p122, %p123
      %p125 = scmp.ne.s32.totalorder %s113, %s114
      %p126 = scmp.eq.s32.totalorder %s22, 1
      %p127 = por %p125, %p126
      %p129 = scmp.ne.s32.totalorder %s114, %s128
      %p130 = scmp.eq.s32.totalorder %s22, 0
      %p131 = por %p129, %p130
      %s132 = ssub.s32 %s23, %s35
      %p133 = scmp.eq.s32.totalorder %s132, 0
      %s135 = sadd.s32 %s134, 1
      %s136 = scalar_select %p133, %s134, %s135
      %p139 = pneg %p133
      %p140 = scmp.eq.s32.totalorder %s16, 1
      %p141 = por %p139, %p140
      %p142 = scmp.ne.s32.totalorder %s134, %s137
      %p143 = scmp.eq.s32.totalorder %s16, 0
      %p144 = por %p142, %p143
      %p145 = scmp.ne.s32.totalorder %s134, %s137
      %p146 = scmp.eq.s32.totalorder %s21, 1
      %p147 = por %p145, %p146
      %p148 = scmp.ne.s32.totalorder %s137, %s138
      %p149 = scmp.eq.s32.totalorder %s21, 0
      %p150 = por %p148, %p149
      %p151 = scmp.ne.s32.totalorder %s137, %s138
      %p152 = scmp.eq.s32.totalorder %s22, 1
      %p153 = por %p151, %p152
      %p155 = scmp.ne.s32.totalorder %s138, %s154
      %p156 = scmp.eq.s32.totalorder %s22, 0
      %p157 = por %p155, %p156
      %p158 = scmp.le.s32.totalorder 1, %s16
      %p159 = scmp.lt.s32.totalorder %s16, 3
      %p160 = pnand %p158, %p159
      %p161 = pneg %p160
      // Predicated region
      $region9: #{tpu_custom_call.1} parent=5 // pred_check
        _
      $region10: #{tpu_custom_call.1} parent=5 // pred_check_branch
        %163 = sbr.rel (%p160) target = $region12
      $region11: #{tpu_custom_call.1} parent=5 // pred_region
        %s164 = ssub.s32 %s16, 1
        // Predicated region
        $region13: #{tpu_custom_call.1} parent=11 // pred_check
          %p165 = pneg %p82
        $region14: #{tpu_custom_call.1} parent=11 // pred_check_branch
          %167 = sbr.rel (%p165) target = $region16
        $region15: #{tpu_custom_call.1} parent=11 // pred_region
          %s168 = smul.u32 64, %s26
          %p169 = scmp.lt.s32.totalorder %s168, 63
          %s170 = scalar_select %p169, %s168, 63
          %s171 = smul.addr %s170, 4
          %s172 = scalar_lea.vmem %s1, %s171
          %s173 = smul.u32 64, %s26
        $region16: #{tpu_custom_call.1} parent=11 // pred_fallthru
          _
        // Predicated region
        $region17: #{tpu_custom_call.1} parent=11 // pred_check
          %p174 = pneg %p103
        $region18: #{tpu_custom_call.1} parent=11 // pred_check_branch
          %176 = sbr.rel (%p174) target = $region20
        $region19: #{tpu_custom_call.1} parent=11 // pred_region
          _
        $region20: #{tpu_custom_call.1} parent=11 // pred_fallthru
          _
        // Predicated region
        $region21: #{tpu_custom_call.1} parent=11 // pred_check
          %p177 = pneg %p124
        $region22: #{tpu_custom_call.1} parent=11 // pred_check_branch
          %179 = sbr.rel (%p177) target = $region24
        $region23: #{tpu_custom_call.1} parent=11 // pred_region
          _
        $region24: #{tpu_custom_call.1} parent=11 // pred_fallthru
          _
      $region12: #{tpu_custom_call.1} parent=5 // pred_fallthru
        _
      %p180 = scmp.lt.s32.totalorder %s16, 2
      // Predicated region
      $region25: #{tpu_custom_call.1} parent=5 // pred_check
        %p181 = pneg %p180
      $region26: #{tpu_custom_call.1} parent=5 // pred_check_branch
        %183 = sbr.rel (%p181) target = $region28
      $region27: #{tpu_custom_call.1} parent=5 // pred_region
        // Predicated region
        $region29: #{tpu_custom_call.1} parent=27 // pred_check
          %p184 = pneg %p50
        $region30: #{tpu_custom_call.1} parent=27 // pred_check_branch
          %186 = sbr.rel (%p184) target = $region32
        $region31: #{tpu_custom_call.1} parent=27 // pred_region
          %s187 = sand.u32 %s40, 1
          %s188 = scalar_lea.sflag [#allocation3], %s187
          %s189 = sand.u32 %s40, 1
          %s190 = smul.addr %s189, 512
          %s191 = scalar_lea.vmem [#allocation2], %s190
          %s192 = smul.u32 32, %s23
          %s193 = smul.u32 4, %s24
          %195 = vsyncadd %s188, 0
          %s196 = smul.addr %s192, 4
          %s197 = sadd.s32 %s193, %s196
          %s198 = smul.addr %s197, 4
          %s199 = scalar_lea.hbm %s0, %s198
          %s200 = sshll.u32 %s199, 4
          %s201 = int_to_ptr.hbm [resolvable:$true] %s200
          %s202 = sshll.u32 %s191, 4
          %s203 = int_to_ptr.vmem [resolvable:$true] %s202
          %208 = dma.hbm_to_vmem [thread:$0]  %s201, 8192, %s203, %s188, 256, 256, 16
        $region32: #{tpu_custom_call.1} parent=27 // pred_fallthru
          _
      $region28: #{tpu_custom_call.1} parent=5 // pred_fallthru
        _
      %p209 = scmp.le.s32.totalorder 1, %s16
      %p210 = scmp.lt.s32.totalorder %s16, 3
      %p211 = pnand %p209, %p210
      %p212 = pneg %p211
      // Predicated region
      $region33: #{tpu_custom_call.1} parent=5 // pred_check
        _
      $region34: #{tpu_custom_call.1} parent=5 // pred_check_branch
        %214 = sbr.rel (%p211) target = $region36
      $region35: #{tpu_custom_call.1} parent=5 // pred_region
        %s215 = ssub.s32 %s16, 1
        %s216 = sand.u32 %s43, 1
        %s217 = scalar_lea.sflag [#allocation3], %s216
        %s218 = sand.u32 %s43, 1
        %s219 = smul.addr %s218, 512
        %s220 = scalar_lea.vmem [#allocation2], %s219
        // Predicated region
        $region37: #{tpu_custom_call.1} parent=35 // pred_check
          %p221 = pneg %p56
        $region38: #{tpu_custom_call.1} parent=35 // pred_check_branch
          %223 = sbr.rel (%p221) target = $region40
        $region39: #{tpu_custom_call.1} parent=35 // pred_region
          %225 = dma.done %s217, 8192
        $region40: #{tpu_custom_call.1} parent=35 // pred_fallthru
          _
        %s226 = sand.u32 %s43, 1
        %s227 = scalar_lea.sflag [#allocation3], %s226
        %s228 = sand.u32 %s43, 1
        %s229 = smul.addr %s228, 512
        %s230 = scalar_lea.vmem [#allocation2], %s229
        %p231 = pneg %p56
        %p232 = pneg %p53
        %s233 = smul.u32 64, %s26
        %p234 = scmp.lt.s32.totalorder %s233, 63
        %s235 = scalar_select %p234, %s233, 63
        %s236 = smul.addr %s235, 4
        %s237 = scalar_lea.vmem %s1, %s236
        %p238 = pneg %p82
        %p239 = pneg %p79
        %p240 = pneg %p103
        %p241 = pneg %p100
        %p242 = pneg %p124
        %p243 = pneg %p121
        %p244 = pneg %p150
        %p245 = pneg %p147
        %s246 = sand.u32 %s137, 1
        %s247 = scalar_lea.sflag [#allocation4], %s246
        %s248 = sand.u32 %s137, 1
        %s249 = smul.addr %s248, 256
        %s250 = scalar_lea.vmem [#allocation5], %s249
        %s251 = smul.u32 32, %s25
        %s252 = smul.u32 4, %s26
        %s253 = smul.u32 64, %s26
        %p254 = scmp.lt.s32.totalorder %s253, 63
        %s255 = scalar_select %p254, %s253, 63
        %s256 = smul.addr %s255, 4
        %s257 = scalar_lea.vmem %s1, %s256
        %s258 = smul.u32 64, %s26
        %s259 = smul.u32 32, %s25
        %p261 = scmp.eq.s32.totalorder %s26, 0
        // Predicated region
        $region41: #{tpu_custom_call.1} parent=35 // pred_check
          %p262 = pneg %p261
        $region42: #{tpu_custom_call.1} parent=35 // pred_check_branch
          %264 = sbr.rel (%p262) target = $region44
        $region43: #{tpu_custom_call.1} parent=35 // pred_region
          %265 = vst [vmem:[%s250] sm:$0xff] 0.0
          %266 = vst [vmem:[%s250 + $0x8] sm:$0xff] 0.0
          %267 = vst [vmem:[%s250 + $0x10] sm:$0xff] 0.0
          %268 = vst [vmem:[%s250 + $0x18] sm:$0xff] 0.0
          %269 = vst [vmem:[%s250 + $0x20] sm:$0xff] 0.0
          %270 = vst [vmem:[%s250 + $0x28] sm:$0xff] 0.0
          %271 = vst [vmem:[%s250 + $0x30] sm:$0xff] 0.0
          %272 = vst [vmem:[%s250 + $0x38] sm:$0xff] 0.0
          %273 = vst [vmem:[%s250 + $0x40] sm:$0xff] 0.0
          %274 = vst [vmem:[%s250 + $0x48] sm:$0xff] 0.0
          %275 = vst [vmem:[%s250 + $0x50] sm:$0xff] 0.0
          %276 = vst [vmem:[%s250 + $0x58] sm:$0xff] 0.0
          %277 = vst [vmem:[%s250 + $0x60] sm:$0xff] 0.0
          %278 = vst [vmem:[%s250 + $0x68] sm:$0xff] 0.0
          %279 = vst [vmem:[%s250 + $0x70] sm:$0xff] 0.0
          %280 = vst [vmem:[%s250 + $0x78] sm:$0xff] 0.0
          %281 = vst [vmem:[%s250 + $0x80] sm:$0xff] 0.0
          %282 = vst [vmem:[%s250 + $0x88] sm:$0xff] 0.0
          %283 = vst [vmem:[%s250 + $0x90] sm:$0xff] 0.0
          %284 = vst [vmem:[%s250 + $0x98] sm:$0xff] 0.0
          %285 = vst [vmem:[%s250 + $0xa0] sm:$0xff] 0.0
          %286 = vst [vmem:[%s250 + $0xa8] sm:$0xff] 0.0
          %287 = vst [vmem:[%s250 + $0xb0] sm:$0xff] 0.0
          %288 = vst [vmem:[%s250 + $0xb8] sm:$0xff] 0.0
          %289 = vst [vmem:[%s250 + $0xc0] sm:$0xff] 0.0
          %290 = vst [vmem:[%s250 + $0xc8] sm:$0xff] 0.0
          %291 = vst [vmem:[%s250 + $0xd0] sm:$0xff] 0.0
          %292 = vst [vmem:[%s250 + $0xd8] sm:$0xff] 0.0
          %293 = vst [vmem:[%s250 + $0xe0] sm:$0xff] 0.0
          %294 = vst [vmem:[%s250 + $0xe8] sm:$0xff] 0.0
          %295 = vst [vmem:[%s250 + $0xf0] sm:$0xff] 0.0
          %296 = vst [vmem:[%s250 + $0xf8] sm:$0xff] 0.0
        $region44: #{tpu_custom_call.1} parent=35 // pred_fallthru
          _
        %v297 = vld [vmem:[%s257] sm:$0xf]
        %v298 = vld [vmem:[%s257 + $0x4] sm:$0xf]
        %v299 = vld [vmem:[%s257 + $0x8] sm:$0xf]
        %v300 = vld [vmem:[%s257 + $0xc] sm:$0xf]
        %v301 = vld [vmem:[%s257 + $0x10] sm:$0xf]
        %v302 = vld [vmem:[%s257 + $0x14] sm:$0xf]
        %v303 = vld [vmem:[%s257 + $0x18] sm:$0xf]
        %v304 = vld [vmem:[%s257 + $0x1c] sm:$0xf]
        %v305 = vld [vmem:[%s257 + $0x20] sm:$0xf]
        %v306 = vld [vmem:[%s257 + $0x24] sm:$0xf]
        %v307 = vld [vmem:[%s257 + $0x28] sm:$0xf]
        %v308 = vld [vmem:[%s257 + $0x2c] sm:$0xf]
        %v309 = vld [vmem:[%s257 + $0x30] sm:$0xf]
        %v310 = vld [vmem:[%s257 + $0x34] sm:$0xf]
        %v311 = vld [vmem:[%s257 + $0x38] sm:$0xf]
        %v312 = vld [vmem:[%s257 + $0x3c] sm:$0xf]
        %v313 = vld [vmem:[%s257 + $0x40] sm:$0xf]
        %v314 = vld [vmem:[%s257 + $0x44] sm:$0xf]
        %v315 = vld [vmem:[%s257 + $0x48] sm:$0xf]
        %v316 = vld [vmem:[%s257 + $0x4c] sm:$0xf]
        %v317 = vld [vmem:[%s257 + $0x50] sm:$0xf]
        %v318 = vld [vmem:[%s257 + $0x54] sm:$0xf]
        %v319 = vld [vmem:[%s257 + $0x58] sm:$0xf]
        %v320 = vld [vmem:[%s257 + $0x5c] sm:$0xf]
        %v321 = vld [vmem:[%s257 + $0x60] sm:$0xf]
        %v322 = vld [vmem:[%s257 + $0x64] sm:$0xf]
        %v323 = vld [vmem:[%s257 + $0x68] sm:$0xf]
        %v324 = vld [vmem:[%s257 + $0x6c] sm:$0xf]
        %v325 = vld [vmem:[%s257 + $0x70] sm:$0xf]
        %v326 = vld [vmem:[%s257 + $0x74] sm:$0xf]
        %v327 = vld [vmem:[%s257 + $0x78] sm:$0xf]
        %v328 = vld [vmem:[%s257 + $0x7c] sm:$0xf]
        %v329 = vld [vmem:[%s257 + $0x80] sm:$0xf]
        %v330 = vld [vmem:[%s257 + $0x84] sm:$0xf]
        %v331 = vld [vmem:[%s257 + $0x88] sm:$0xf]
        %v332 = vld [vmem:[%s257 + $0x8c] sm:$0xf]
        %v333 = vld [vmem:[%s257 + $0x90] sm:$0xf]
        %v334 = vld [vmem:[%s257 + $0x94] sm:$0xf]
        %v335 = vld [vmem:[%s257 + $0x98] sm:$0xf]
        %v336 = vld [vmem:[%s257 + $0x9c] sm:$0xf]
        %v337 = vld [vmem:[%s257 + $0xa0] sm:$0xf]
        %v338 = vld [vmem:[%s257 + $0xa4] sm:$0xf]
        %v339 = vld [vmem:[%s257 + $0xa8] sm:$0xf]
        %v340 = vld [vmem:[%s257 + $0xac] sm:$0xf]
        %v341 = vld [vmem:[%s257 + $0xb0] sm:$0xf]
        %v342 = vld [vmem:[%s257 + $0xb4] sm:$0xf]
        %v343 = vld [vmem:[%s257 + $0xb8] sm:$0xf]
        %v344 = vld [vmem:[%s257 + $0xbc] sm:$0xf]
        %v345 = vld [vmem:[%s257 + $0xc0] sm:$0xf]
        %v346 = vld [vmem:[%s257 + $0xc4] sm:$0xf]
        %v347 = vld [vmem:[%s257 + $0xc8] sm:$0xf]
        %v348 = vld [vmem:[%s257 + $0xcc] sm:$0xf]
        %v349 = vld [vmem:[%s257 + $0xd0] sm:$0xf]
        %v350 = vld [vmem:[%s257 + $0xd4] sm:$0xf]
        %v351 = vld [vmem:[%s257 + $0xd8] sm:$0xf]
        %v352 = vld [vmem:[%s257 + $0xdc] sm:$0xf]
        %v353 = vld [vmem:[%s257 + $0xe0] sm:$0xf]
        %v354 = vld [vmem:[%s257 + $0xe4] sm:$0xf]
        %v355 = vld [vmem:[%s257 + $0xe8] sm:$0xf]
        %v356 = vld [vmem:[%s257 + $0xec] sm:$0xf]
        %v357 = vld [vmem:[%s257 + $0xf0] sm:$0xf]
        %v358 = vld [vmem:[%s257 + $0xf4] sm:$0xf]
        %v359 = vld [vmem:[%s257 + $0xf8] sm:$0xf]
        %v360 = vld [vmem:[%s257 + $0xfc] sm:$0xf]
        %v361 = vld [vmem:[%s2] sm:$0xf]
        %v362 = vld [vmem:[%s2 + $0x4] sm:$0xf]
        %v363 = vld [vmem:[%s2 + $0x8] sm:$0xf]
        %v364 = vld [vmem:[%s2 + $0xc] sm:$0xf]
        %v365 = vld [vmem:[%s2 + $0x10] sm:$0xf]
        %v366 = vld [vmem:[%s2 + $0x14] sm:$0xf]
        %v367 = vld [vmem:[%s2 + $0x18] sm:$0xf]
        %v368 = vld [vmem:[%s2 + $0x1c] sm:$0xf]
        %v433 = vunpack.c.l.b16 %v297
        %v434 = vunpack.c.l.b16 %v298
        %v435 = vunpack.c.l.b16 %v299
        %v436 = vunpack.c.l.b16 %v300
        %v437 = vunpack.c.l.b16 %v301
        %v438 = vunpack.c.l.b16 %v302
        %v439 = vunpack.c.l.b16 %v303
        %v440 = vunpack.c.l.b16 %v304
        %v441 = vunpack.c.l.b16 %v305
        %v442 = vunpack.c.l.b16 %v306
        %v443 = vunpack.c.l.b16 %v307
        %v444 = vunpack.c.l.b16 %v308
        %v445 = vunpack.c.l.b16 %v309
        %v446 = vunpack.c.l.b16 %v310
        %v447 = vunpack.c.l.b16 %v311
        %v448 = vunpack.c.l.b16 %v312
        %v449 = vunpack.c.l.b16 %v313
        %v450 = vunpack.c.l.b16 %v314
        %v451 = vunpack.c.l.b16 %v315
        %v452 = vunpack.c.l.b16 %v316
        %v453 = vunpack.c.l.b16 %v317
        %v454 = vunpack.c.l.b16 %v318
        %v455 = vunpack.c.l.b16 %v319
        %v456 = vunpack.c.l.b16 %v320
        %v457 = vunpack.c.l.b16 %v321
        %v458 = vunpack.c.l.b16 %v322
        %v459 = vunpack.c.l.b16 %v323
        %v460 = vunpack.c.l.b16 %v324
        %v461 = vunpack.c.l.b16 %v325
        %v462 = vunpack.c.l.b16 %v326
        %v463 = vunpack.c.l.b16 %v327
        %v464 = vunpack.c.l.b16 %v328
        %v465 = vunpack.c.l.b16 %v329
        %v466 = vunpack.c.l.b16 %v330
        %v467 = vunpack.c.l.b16 %v331
        %v468 = vunpack.c.l.b16 %v332
        %v469 = vunpack.c.l.b16 %v333
        %v470 = vunpack.c.l.b16 %v334
        %v471 = vunpack.c.l.b16 %v335
        %v472 = vunpack.c.l.b16 %v336
        %v473 = vunpack.c.l.b16 %v337
        %v474 = vunpack.c.l.b16 %v338
        %v475 = vunpack.c.l.b16 %v339
        %v476 = vunpack.c.l.b16 %v340
        %v477 = vunpack.c.l.b16 %v341
        %v478 = vunpack.c.l.b16 %v342
        %v479 = vunpack.c.l.b16 %v343
        %v480 = vunpack.c.l.b16 %v344
        %v481 = vunpack.c.l.b16 %v345
        %v482 = vunpack.c.l.b16 %v346
        %v483 = vunpack.c.l.b16 %v347
        %v484 = vunpack.c.l.b16 %v348
        %v485 = vunpack.c.l.b16 %v349
        %v486 = vunpack.c.l.b16 %v350
        %v487 = vunpack.c.l.b16 %v351
        %v488 = vunpack.c.l.b16 %v352
        %v489 = vunpack.c.l.b16 %v353
        %v490 = vunpack.c.l.b16 %v354
        %v491 = vunpack.c.l.b16 %v355
        %v492 = vunpack.c.l.b16 %v356
        %v493 = vunpack.c.l.b16 %v357
        %v494 = vunpack.c.l.b16 %v358
        %v495 = vunpack.c.l.b16 %v359
        %v496 = vunpack.c.l.b16 %v360
        %v497 = vpack.c.b16 %v434, %v433
        %v498 = vpack.c.b16 %v436, %v435
        %v499 = vpack.c.b16 %v438, %v437
        %v500 = vpack.c.b16 %v440, %v439
        %v501 = vpack.c.b16 %v442, %v441
        %v502 = vpack.c.b16 %v444, %v443
        %v503 = vpack.c.b16 %v446, %v445
        %v504 = vpack.c.b16 %v448, %v447
        %v505 = vpack.c.b16 %v450, %v449
        %v506 = vpack.c.b16 %v452, %v451
        %v507 = vpack.c.b16 %v454, %v453
        %v508 = vpack.c.b16 %v456, %v455
        %v509 = vpack.c.b16 %v458, %v457
        %v510 = vpack.c.b16 %v460, %v459
        %v511 = vpack.c.b16 %v462, %v461
        %v512 = vpack.c.b16 %v464, %v463
        %v513 = vpack.c.b16 %v466, %v465
        %v514 = vpack.c.b16 %v468, %v467
        %v515 = vpack.c.b16 %v470, %v469
        %v516 = vpack.c.b16 %v472, %v471
        %v517 = vpack.c.b16 %v474, %v473
        %v518 = vpack.c.b16 %v476, %v475
        %v519 = vpack.c.b16 %v478, %v477
        %v520 = vpack.c.b16 %v480, %v479
        %v521 = vpack.c.b16 %v482, %v481
        %v522 = vpack.c.b16 %v484, %v483
        %v523 = vpack.c.b16 %v486, %v485
        %v524 = vpack.c.b16 %v488, %v487
        %v525 = vpack.c.b16 %v490, %v489
        %v526 = vpack.c.b16 %v492, %v491
        %v527 = vpack.c.b16 %v494, %v493
        %v528 = vpack.c.b16 %v496, %v495
        %v537 = vunpack.c.l.b16 %v361
        %v538 = vunpack.c.l.b16 %v362
        %v539 = vunpack.c.l.b16 %v363
        %v540 = vunpack.c.l.b16 %v364
        %v541 = vunpack.c.l.b16 %v365
        %v542 = vunpack.c.l.b16 %v366
        %v543 = vunpack.c.l.b16 %v367
        %v544 = vunpack.c.l.b16 %v368
        %v545 = vpack.c.b16 %v538, %v537
        %v546 = vpack.c.b16 %v540, %v539
        %v547 = vpack.c.b16 %v542, %v541
        %v548 = vpack.c.b16 %v544, %v543
        %vm553 = vcmask 523264
        %v555 = vsel %vm553, %v497, 0
        %v558 = vsel %vm553, %v498, 0
        %v561 = vsel %vm553, %v499, 0
        %v564 = vsel %vm553, %v500, 0
        %v567 = vsel %vm553, %v501, 0
        %v570 = vsel %vm553, %v502, 0
        %v573 = vsel %vm553, %v503, 0
        %v576 = vsel %vm553, %v504, 0
        %v579 = vsel %vm553, %v505, 0
        %v582 = vsel %vm553, %v506, 0
        %v585 = vsel %vm553, %v507, 0
        %v588 = vsel %vm553, %v508, 0
        %v591 = vsel %vm553, %v509, 0
        %v594 = vsel %vm553, %v510, 0
        %v597 = vsel %vm553, %v511, 0
        %v600 = vsel %vm553, %v512, 0
        %v603 = vsel %vm553, %v513, 0
        %v606 = vsel %vm553, %v514, 0
        %v609 = vsel %vm553, %v515, 0
        %v612 = vsel %vm553, %v516, 0
        %v615 = vsel %vm553, %v517, 0
        %v618 = vsel %vm553, %v518, 0
        %v621 = vsel %vm553, %v519, 0
        %v624 = vsel %vm553, %v520, 0
        %v627 = vsel %vm553, %v521, 0
        %v630 = vsel %vm553, %v522, 0
        %v633 = vsel %vm553, %v523, 0
        %v636 = vsel %vm553, %v524, 0
        %v639 = vsel %vm553, %v525, 0
        %v642 = vsel %vm553, %v526, 0
        %v645 = vsel %vm553, %v527, 0
        %v648 = vsel %vm553, %v528, 0
        %650 = vmatpush.bf16.msra.mxu0 0
        %651 = vmatpush.bf16.msra.mxu0 0
        %652 = vmatpush.bf16.msra.mxu0 0
        %653 = vmatpush.bf16.msra.mxu0 0
        %654 = vmatpush.bf16.msra.mxu0 %v548
        %655 = vmatpush.bf16.msra.mxu0 %v547
        %656 = vmatpush.bf16.msra.mxu0 %v546
        %657 = vmatpush.bf16.msra.mxu0 %v545
        %658 = vmatmul.bf16.gmra.mxu0 %v555
        %v659 = vpop.f32.mrf.mxu0
        %v660 = vadd.f32 0.0, %v659
        %v661 = vpop.f32.mrf.mxu0
        %v662 = vadd.f32 0.0, %v661
        %663 = vmatmul.bf16.gmra.mxu0 %v558
        %v664 = vpop.f32.mrf.mxu0
        %v665 = vadd.f32 0.0, %v664
        %v666 = vpop.f32.mrf.mxu0
        %v667 = vadd.f32 0.0, %v666
        %668 = vmatmul.bf16.gmra.mxu0 %v561
        %v669 = vpop.f32.mrf.mxu0
        %v670 = vadd.f32 0.0, %v669
        %v671 = vpop.f32.mrf.mxu0
        %v672 = vadd.f32 0.0, %v671
        %673 = vmatmul.bf16.gmra.mxu0 %v564
        %v674 = vpop.f32.mrf.mxu0
        %v675 = vadd.f32 0.0, %v674
        %v676 = vpop.f32.mrf.mxu0
        %v677 = vadd.f32 0.0, %v676
        %678 = vmatmul.bf16.gmra.mxu0 %v567
        %v679 = vpop.f32.mrf.mxu0
        %v680 = vadd.f32 0.0, %v679
        %v681 = vpop.f32.mrf.mxu0
        %v682 = vadd.f32 0.0, %v681
        %683 = vmatmul.bf16.gmra.mxu0 %v570
        %v684 = vpop.f32.mrf.mxu0
        %v685 = vadd.f32 0.0, %v684
        %v686 = vpop.f32.mrf.mxu0
        %v687 = vadd.f32 0.0, %v686
        %688 = vmatmul.bf16.gmra.mxu0 %v573
        %v689 = vpop.f32.mrf.mxu0
        %v690 = vadd.f32 0.0, %v689
        %v691 = vpop.f32.mrf.mxu0
        %v692 = vadd.f32 0.0, %v691
        %693 = vmatmul.bf16.gmra.mxu0 %v576
        %v694 = vpop.f32.mrf.mxu0
        %v695 = vadd.f32 0.0, %v694
        %v696 = vpop.f32.mrf.mxu0
        %v697 = vadd.f32 0.0, %v696
        %698 = vmatmul.bf16.gmra.mxu0 %v579
        %v699 = vpop.f32.mrf.mxu0
        %v700 = vadd.f32 0.0, %v699
        %v701 = vpop.f32.mrf.mxu0
        %v702 = vadd.f32 0.0, %v701
        %703 = vmatmul.bf16.gmra.mxu0 %v582
        %v704 = vpop.f32.mrf.mxu0
        %v705 = vadd.f32 0.0, %v704
        %v706 = vpop.f32.mrf.mxu0
        %v707 = vadd.f32 0.0, %v706
        %708 = vmatmul.bf16.gmra.mxu0 %v585
        %v709 = vpop.f32.mrf.mxu0
        %v710 = vadd.f32 0.0, %v709
        %v711 = vpop.f32.mrf.mxu0
        %v712 = vadd.f32 0.0, %v711
        %713 = vmatmul.bf16.gmra.mxu0 %v588
        %v714 = vpop.f32.mrf.mxu0
        %v715 = vadd.f32 0.0, %v714
        %v716 = vpop.f32.mrf.mxu0
        %v717 = vadd.f32 0.0, %v716
        %718 = vmatmul.bf16.gmra.mxu0 %v591
        %v719 = vpop.f32.mrf.mxu0
        %v720 = vadd.f32 0.0, %v719
        %v721 = vpop.f32.mrf.mxu0
        %v722 = vadd.f32 0.0, %v721
        %723 = vmatmul.bf16.gmra.mxu0 %v594
        %v724 = vpop.f32.mrf.mxu0
        %v725 = vadd.f32 0.0, %v724
        %v726 = vpop.f32.mrf.mxu0
        %v727 = vadd.f32 0.0, %v726
        %728 = vmatmul.bf16.gmra.mxu0 %v597
        %v729 = vpop.f32.mrf.mxu0
        %v730 = vadd.f32 0.0, %v729
        %v731 = vpop.f32.mrf.mxu0
        %v732 = vadd.f32 0.0, %v731
        %733 = vmatmul.bf16.gmra.mxu0 %v600
        %v734 = vpop.f32.mrf.mxu0
        %v735 = vadd.f32 0.0, %v734
        %v736 = vpop.f32.mrf.mxu0
        %v737 = vadd.f32 0.0, %v736
        %738 = vmatmul.bf16.gmra.mxu0 %v603
        %v739 = vpop.f32.mrf.mxu0
        %v740 = vadd.f32 0.0, %v739
        %v741 = vpop.f32.mrf.mxu0
        %v742 = vadd.f32 0.0, %v741
        %743 = vmatmul.bf16.gmra.mxu0 %v606
        %v744 = vpop.f32.mrf.mxu0
        %v745 = vadd.f32 0.0, %v744
        %v746 = vpop.f32.mrf.mxu0
        %v747 = vadd.f32 0.0, %v746
        %748 = vmatmul.bf16.gmra.mxu0 %v609
        %v749 = vpop.f32.mrf.mxu0
        %v750 = vadd.f32 0.0, %v749
        %v751 = vpop.f32.mrf.mxu0
        %v752 = vadd.f32 0.0, %v751
        %753 = vmatmul.bf16.gmra.mxu0 %v612
        %v754 = vpop.f32.mrf.mxu0
        %v755 = vadd.f32 0.0, %v754
        %v756 = vpop.f32.mrf.mxu0
        %v757 = vadd.f32 0.0, %v756
        %758 = vmatmul.bf16.gmra.mxu0 %v615
        %v759 = vpop.f32.mrf.mxu0
        %v760 = vadd.f32 0.0, %v759
        %v761 = vpop.f32.mrf.mxu0
        %v762 = vadd.f32 0.0, %v761
        %763 = vmatmul.bf16.gmra.mxu0 %v618
        %v764 = vpop.f32.mrf.mxu0
        %v765 = vadd.f32 0.0, %v764
        %v766 = vpop.f32.mrf.mxu0
        %v767 = vadd.f32 0.0, %v766
        %768 = vmatmul.bf16.gmra.mxu0 %v621
        %v769 = vpop.f32.mrf.mxu0
        %v770 = vadd.f32 0.0, %v769
        %v771 = vpop.f32.mrf.mxu0
        %v772 = vadd.f32 0.0, %v771
        %773 = vmatmul.bf16.gmra.mxu0 %v624
        %v774 = vpop.f32.mrf.mxu0
        %v775 = vadd.f32 0.0, %v774
        %v776 = vpop.f32.mrf.mxu0
        %v777 = vadd.f32 0.0, %v776
        %778 = vmatmul.bf16.gmra.mxu0 %v627
        %v779 = vpop.f32.mrf.mxu0
        %v780 = vadd.f32 0.0, %v779
        %v781 = vpop.f32.mrf.mxu0
        %v782 = vadd.f32 0.0, %v781
        %783 = vmatmul.bf16.gmra.mxu0 %v630
        %v784 = vpop.f32.mrf.mxu0
        %v785 = vadd.f32 0.0, %v784
        %v786 = vpop.f32.mrf.mxu0
        %v787 = vadd.f32 0.0, %v786
        %788 = vmatmul.bf16.gmra.mxu0 %v633
        %v789 = vpop.f32.mrf.mxu0
        %v790 = vadd.f32 0.0, %v789
        %v791 = vpop.f32.mrf.mxu0
        %v792 = vadd.f32 0.0, %v791
        %793 = vmatmul.bf16.gmra.mxu0 %v636
        %v794 = vpop.f32.mrf.mxu0
        %v795 = vadd.f32 0.0, %v794
        %v796 = vpop.f32.mrf.mxu0
        %v797 = vadd.f32 0.0, %v796
        %798 = vmatmul.bf16.gmra.mxu0 %v639
        %v799 = vpop.f32.mrf.mxu0
        %v800 = vadd.f32 0.0, %v799
        %v801 = vpop.f32.mrf.mxu0
        %v802 = vadd.f32 0.0, %v801
        %803 = vmatmul.bf16.gmra.mxu0 %v642
        %v804 = vpop.f32.mrf.mxu0
        %v805 = vadd.f32 0.0, %v804
        %v806 = vpop.f32.mrf.mxu0
        %v807 = vadd.f32 0.0, %v806
        %808 = vmatmul.bf16.gmra.mxu0 %v645
        %v809 = vpop.f32.mrf.mxu0
        %v810 = vadd.f32 0.0, %v809
        %v811 = vpop.f32.mrf.mxu0
        %v812 = vadd.f32 0.0, %v811
        %813 = vmatmul.bf16.gmra.mxu0 %v648
        %v814 = vpop.f32.mrf.mxu0
        %v815 = vadd.f32 0.0, %v814
        %v816 = vpop.f32.mrf.mxu0
        %v817 = vadd.f32 0.0, %v816
        %818 = vdwg.mxu0
        %v819 = vld [vmem:[%s250] sm:$0xff]
        %v820 = vld [vmem:[%s250 + $0x8] sm:$0xff]
        %v821 = vld [vmem:[%s250 + $0x10] sm:$0xff]
        %v822 = vld [vmem:[%s250 + $0x18] sm:$0xff]
        %v823 = vld [vmem:[%s250 + $0x20] sm:$0xff]
        %v824 = vld [vmem:[%s250 + $0x28] sm:$0xff]
        %v825 = vld [vmem:[%s250 + $0x30] sm:$0xff]
        %v826 = vld [vmem:[%s250 + $0x38] sm:$0xff]
        %v827 = vld [vmem:[%s250 + $0x40] sm:$0xff]
        %v828 = vld [vmem:[%s250 + $0x48] sm:$0xff]
        %v829 = vld [vmem:[%s250 + $0x50] sm:$0xff]
        %v830 = vld [vmem:[%s250 + $0x58] sm:$0xff]
        %v831 = vld [vmem:[%s250 + $0x60] sm:$0xff]
        %v832 = vld [vmem:[%s250 + $0x68] sm:$0xff]
        %v833 = vld [vmem:[%s250 + $0x70] sm:$0xff]
        %v834 = vld [vmem:[%s250 + $0x78] sm:$0xff]
        %v835 = vld [vmem:[%s250 + $0x80] sm:$0xff]
        %v836 = vld [vmem:[%s250 + $0x88] sm:$0xff]
        %v837 = vld [vmem:[%s250 + $0x90] sm:$0xff]
        %v838 = vld [vmem:[%s250 + $0x98] sm:$0xff]
        %v839 = vld [vmem:[%s250 + $0xa0] sm:$0xff]
        %v840 = vld [vmem:[%s250 + $0xa8] sm:$0xff]
        %v841 = vld [vmem:[%s250 + $0xb0] sm:$0xff]
        %v842 = vld [vmem:[%s250 + $0xb8] sm:$0xff]
        %v843 = vld [vmem:[%s250 + $0xc0] sm:$0xff]
        %v844 = vld [vmem:[%s250 + $0xc8] sm:$0xff]
        %v845 = vld [vmem:[%s250 + $0xd0] sm:$0xff]
        %v846 = vld [vmem:[%s250 + $0xd8] sm:$0xff]
        %v847 = vld [vmem:[%s250 + $0xe0] sm:$0xff]
        %v848 = vld [vmem:[%s250 + $0xe8] sm:$0xff]
        %v849 = vld [vmem:[%s250 + $0xf0] sm:$0xff]
        %v850 = vld [vmem:[%s250 + $0xf8] sm:$0xff]
        %v851 = vld [vmem:[%s220] sm:$0xff]
        %v852 = vld [vmem:[%s220 + $0x8] sm:$0xff]
        %v853 = vld [vmem:[%s220 + $0x10] sm:$0xff]
        %v854 = vld [vmem:[%s220 + $0x18] sm:$0xff]
        %v855 = vld [vmem:[%s220 + $0x20] sm:$0xff]
        %v856 = vld [vmem:[%s220 + $0x28] sm:$0xff]
        %v857 = vld [vmem:[%s220 + $0x30] sm:$0xff]
        %v858 = vld [vmem:[%s220 + $0x38] sm:$0xff]
        %v859 = vld [vmem:[%s220 + $0x40] sm:$0xff]
        %v860 = vld [vmem:[%s220 + $0x48] sm:$0xff]
        %v861 = vld [vmem:[%s220 + $0x50] sm:$0xff]
        %v862 = vld [vmem:[%s220 + $0x58] sm:$0xff]
        %v863 = vld [vmem:[%s220 + $0x60] sm:$0xff]
        %v864 = vld [vmem:[%s220 + $0x68] sm:$0xff]
        %v865 = vld [vmem:[%s220 + $0x70] sm:$0xff]
        %v866 = vld [vmem:[%s220 + $0x78] sm:$0xff]
        %v867 = vld [vmem:[%s220 + $0x80] sm:$0xff]
        %v868 = vld [vmem:[%s220 + $0x88] sm:$0xff]
        %v869 = vld [vmem:[%s220 + $0x90] sm:$0xff]
        %v870 = vld [vmem:[%s220 + $0x98] sm:$0xff]
        %v871 = vld [vmem:[%s220 + $0xa0] sm:$0xff]
        %v872 = vld [vmem:[%s220 + $0xa8] sm:$0xff]
        %v873 = vld [vmem:[%s220 + $0xb0] sm:$0xff]
        %v874 = vld [vmem:[%s220 + $0xb8] sm:$0xff]
        %v875 = vld [vmem:[%s220 + $0xc0] sm:$0xff]
        %v876 = vld [vmem:[%s220 + $0xc8] sm:$0xff]
        %v877 = vld [vmem:[%s220 + $0xd0] sm:$0xff]
        %v878 = vld [vmem:[%s220 + $0xd8] sm:$0xff]
        %v879 = vld [vmem:[%s220 + $0xe0] sm:$0xff]
        %v880 = vld [vmem:[%s220 + $0xe8] sm:$0xff]
        %v881 = vld [vmem:[%s220 + $0xf0] sm:$0xff]
        %v882 = vld [vmem:[%s220 + $0xf8] sm:$0xff]
        %v883 = vld [vmem:[%s220 + $0x100] sm:$0xff]
        %v884 = vld [vmem:[%s220 + $0x108] sm:$0xff]
        %v885 = vld [vmem:[%s220 + $0x110] sm:$0xff]
        %v886 = vld [vmem:[%s220 + $0x118] sm:$0xff]
        %v887 = vld [vmem:[%s220 + $0x120] sm:$0xff]
        %v888 = vld [vmem:[%s220 + $0x128] sm:$0xff]
        %v889 = vld [vmem:[%s220 + $0x130] sm:$0xff]
        %v890 = vld [vmem:[%s220 + $0x138] sm:$0xff]
        %v891 = vld [vmem:[%s220 + $0x140] sm:$0xff]
        %v892 = vld [vmem:[%s220 + $0x148] sm:$0xff]
        %v893 = vld [vmem:[%s220 + $0x150] sm:$0xff]
        %v894 = vld [vmem:[%s220 + $0x158] sm:$0xff]
        %v895 = vld [vmem:[%s220 + $0x160] sm:$0xff]
        %v896 = vld [vmem:[%s220 + $0x168] sm:$0xff]
        %v897 = vld [vmem:[%s220 + $0x170] sm:$0xff]
        %v898 = vld [vmem:[%s220 + $0x178] sm:$0xff]
        %v899 = vld [vmem:[%s220 + $0x180] sm:$0xff]
        %v900 = vld [vmem:[%s220 + $0x188] sm:$0xff]
        %v901 = vld [vmem:[%s220 + $0x190] sm:$0xff]
        %v902 = vld [vmem:[%s220 + $0x198] sm:$0xff]
        %v903 = vld [vmem:[%s220 + $0x1a0] sm:$0xff]
        %v904 = vld [vmem:[%s220 + $0x1a8] sm:$0xff]
        %v905 = vld [vmem:[%s220 + $0x1b0] sm:$0xff]
        %v906 = vld [vmem:[%s220 + $0x1b8] sm:$0xff]
        %v907 = vld [vmem:[%s220 + $0x1c0] sm:$0xff]
        %v908 = vld [vmem:[%s220 + $0x1c8] sm:$0xff]
        %v909 = vld [vmem:[%s220 + $0x1d0] sm:$0xff]
        %v910 = vld [vmem:[%s220 + $0x1d8] sm:$0xff]
        %v911 = vld [vmem:[%s220 + $0x1e0] sm:$0xff]
        %v912 = vld [vmem:[%s220 + $0x1e8] sm:$0xff]
        %v913 = vld [vmem:[%s220 + $0x1f0] sm:$0xff]
        %v914 = vld [vmem:[%s220 + $0x1f8] sm:$0xff]
        %v915 = vpack.c.bf16 %v662, %v660
        %v916 = vpack.c.bf16 %v667, %v665
        %v917 = vpack.c.bf16 %v672, %v670
        %v918 = vpack.c.bf16 %v677, %v675
        %v919 = vpack.c.bf16 %v682, %v680
        %v920 = vpack.c.bf16 %v687, %v685
        %v921 = vpack.c.bf16 %v692, %v690
        %v922 = vpack.c.bf16 %v697, %v695
        %v923 = vpack.c.bf16 %v702, %v700
        %v924 = vpack.c.bf16 %v707, %v705
        %v925 = vpack.c.bf16 %v712, %v710
        %v926 = vpack.c.bf16 %v717, %v715
        %v927 = vpack.c.bf16 %v722, %v720
        %v928 = vpack.c.bf16 %v727, %v725
        %v929 = vpack.c.bf16 %v732, %v730
        %v930 = vpack.c.bf16 %v737, %v735
        %v931 = vpack.c.bf16 %v742, %v740
        %v932 = vpack.c.bf16 %v747, %v745
        %v933 = vpack.c.bf16 %v752, %v750
        %v934 = vpack.c.bf16 %v757, %v755
        %v935 = vpack.c.bf16 %v762, %v760
        %v936 = vpack.c.bf16 %v767, %v765
        %v937 = vpack.c.bf16 %v772, %v770
        %v938 = vpack.c.bf16 %v777, %v775
        %v939 = vpack.c.bf16 %v782, %v780
        %v940 = vpack.c.bf16 %v787, %v785
        %v941 = vpack.c.bf16 %v792, %v790
        %v942 = vpack.c.bf16 %v797, %v795
        %v943 = vpack.c.bf16 %v802, %v800
        %v944 = vpack.c.bf16 %v807, %v805
        %v945 = vpack.c.bf16 %v812, %v810
        %v946 = vpack.c.bf16 %v817, %v815
        %v1011 = vunpack.c.l.b16 %v851
        %v1012 = vunpack.c.h.b16 %v851
        %v1013 = vunpack.c.l.b16 %v852
        %v1014 = vunpack.c.h.b16 %v852
        %v1015 = vunpack.c.l.b16 %v853
        %v1016 = vunpack.c.h.b16 %v853
        %v1017 = vunpack.c.l.b16 %v854
        %v1018 = vunpack.c.h.b16 %v854
        %v1019 = vunpack.c.l.b16 %v855
        %v1020 = vunpack.c.h.b16 %v855
        %v1021 = vunpack.c.l.b16 %v856
        %v1022 = vunpack.c.h.b16 %v856
        %v1023 = vunpack.c.l.b16 %v857
        %v1024 = vunpack.c.h.b16 %v857
        %v1025 = vunpack.c.l.b16 %v858
        %v1026 = vunpack.c.h.b16 %v858
        %v1027 = vunpack.c.l.b16 %v859
        %v1028 = vunpack.c.h.b16 %v859
        %v1029 = vunpack.c.l.b16 %v860
        %v1030 = vunpack.c.h.b16 %v860
        %v1031 = vunpack.c.l.b16 %v861
        %v1032 = vunpack.c.h.b16 %v861
        %v1033 = vunpack.c.l.b16 %v862
        %v1034 = vunpack.c.h.b16 %v862
        %v1035 = vunpack.c.l.b16 %v863
        %v1036 = vunpack.c.h.b16 %v863
        %v1037 = vunpack.c.l.b16 %v864
        %v1038 = vunpack.c.h.b16 %v864
        %v1039 = vunpack.c.l.b16 %v865
        %v1040 = vunpack.c.h.b16 %v865
        %v1041 = vunpack.c.l.b16 %v866
        %v1042 = vunpack.c.h.b16 %v866
        %v1043 = vunpack.c.l.b16 %v867
        %v1044 = vunpack.c.h.b16 %v867
        %v1045 = vunpack.c.l.b16 %v868
        %v1046 = vunpack.c.h.b16 %v868
        %v1047 = vunpack.c.l.b16 %v869
        %v1048 = vunpack.c.h.b16 %v869
        %v1049 = vunpack.c.l.b16 %v870
        %v1050 = vunpack.c.h.b16 %v870
        %v1051 = vunpack.c.l.b16 %v871
        %v1052 = vunpack.c.h.b16 %v871
        %v1053 = vunpack.c.l.b16 %v872
        %v1054 = vunpack.c.h.b16 %v872
        %v1055 = vunpack.c.l.b16 %v873
        %v1056 = vunpack.c.h.b16 %v873
        %v1057 = vunpack.c.l.b16 %v874
        %v1058 = vunpack.c.h.b16 %v874
        %v1059 = vunpack.c.l.b16 %v875
        %v1060 = vunpack.c.h.b16 %v875
        %v1061 = vunpack.c.l.b16 %v876
        %v1062 = vunpack.c.h.b16 %v876
        %v1063 = vunpack.c.l.b16 %v877
        %v1064 = vunpack.c.h.b16 %v877
        %v1065 = vunpack.c.l.b16 %v878
        %v1066 = vunpack.c.h.b16 %v878
        %v1067 = vunpack.c.l.b16 %v879
        %v1068 = vunpack.c.h.b16 %v879
        %v1069 = vunpack.c.l.b16 %v880
        %v1070 = vunpack.c.h.b16 %v880
        %v1071 = vunpack.c.l.b16 %v881
        %v1072 = vunpack.c.h.b16 %v881
        %v1073 = vunpack.c.l.b16 %v882
        %v1074 = vunpack.c.h.b16 %v882
        %v1075 = vunpack.c.l.b16 %v883
        %v1076 = vunpack.c.h.b16 %v883
        %v1077 = vunpack.c.l.b16 %v884
        %v1078 = vunpack.c.h.b16 %v884
        %v1079 = vunpack.c.l.b16 %v885
        %v1080 = vunpack.c.h.b16 %v885
        %v1081 = vunpack.c.l.b16 %v886
        %v1082 = vunpack.c.h.b16 %v886
        %v1083 = vunpack.c.l.b16 %v887
        %v1084 = vunpack.c.h.b16 %v887
        %v1085 = vunpack.c.l.b16 %v888
        %v1086 = vunpack.c.h.b16 %v888
        %v1087 = vunpack.c.l.b16 %v889
        %v1088 = vunpack.c.h.b16 %v889
        %v1089 = vunpack.c.l.b16 %v890
        %v1090 = vunpack.c.h.b16 %v890
        %v1091 = vunpack.c.l.b16 %v891
        %v1092 = vunpack.c.h.b16 %v891
        %v1093 = vunpack.c.l.b16 %v892
        %v1094 = vunpack.c.h.b16 %v892
        %v1095 = vunpack.c.l.b16 %v893
        %v1096 = vunpack.c.h.b16 %v893
        %v1097 = vunpack.c.l.b16 %v894
        %v1098 = vunpack.c.h.b16 %v894
        %v1099 = vunpack.c.l.b16 %v895
        %v1100 = vunpack.c.h.b16 %v895
        %v1101 = vunpack.c.l.b16 %v896
        %v1102 = vunpack.c.h.b16 %v896
        %v1103 = vunpack.c.l.b16 %v897
        %v1104 = vunpack.c.h.b16 %v897
        %v1105 = vunpack.c.l.b16 %v898
        %v1106 = vunpack.c.h.b16 %v898
        %v1107 = vunpack.c.l.b16 %v899
        %v1108 = vunpack.c.h.b16 %v899
        %v1109 = vunpack.c.l.b16 %v900
        %v1110 = vunpack.c.h.b16 %v900
        %v1111 = vunpack.c.l.b16 %v901
        %v1112 = vunpack.c.h.b16 %v901
        %v1113 = vunpack.c.l.b16 %v902
        %v1114 = vunpack.c.h.b16 %v902
        %v1115 = vunpack.c.l.b16 %v903
        %v1116 = vunpack.c.h.b16 %v903
        %v1117 = vunpack.c.l.b16 %v904
        %v1118 = vunpack.c.h.b16 %v904
        %v1119 = vunpack.c.l.b16 %v905
        %v1120 = vunpack.c.h.b16 %v905
        %v1121 = vunpack.c.l.b16 %v906
        %v1122 = vunpack.c.h.b16 %v906
        %v1123 = vunpack.c.l.b16 %v907
        %v1124 = vunpack.c.h.b16 %v907
        %v1125 = vunpack.c.l.b16 %v908
        %v1126 = vunpack.c.h.b16 %v908
        %v1127 = vunpack.c.l.b16 %v909
        %v1128 = vunpack.c.h.b16 %v909
        %v1129 = vunpack.c.l.b16 %v910
        %v1130 = vunpack.c.h.b16 %v910
        %v1131 = vunpack.c.l.b16 %v911
        %v1132 = vunpack.c.h.b16 %v911
        %v1133 = vunpack.c.l.b16 %v912
        %v1134 = vunpack.c.h.b16 %v912
        %v1135 = vunpack.c.l.b16 %v913
        %v1136 = vunpack.c.h.b16 %v913
        %v1137 = vunpack.c.l.b16 %v914
        %v1138 = vunpack.c.h.b16 %v914
        %v1139 = vpack.c.b16 %v1015, %v1011
        %v1140 = vpack.c.b16 %v1016, %v1012
        %v1141 = vpack.c.b16 %v1017, %v1013
        %v1142 = vpack.c.b16 %v1018, %v1014
        %v1143 = vpack.c.b16 %v1023, %v1019
        %v1144 = vpack.c.b16 %v1024, %v1020
        %v1145 = vpack.c.b16 %v1025, %v1021
        %v1146 = vpack.c.b16 %v1026, %v1022
        %v1147 = vpack.c.b16 %v1031, %v1027
        %v1148 = vpack.c.b16 %v1032, %v1028
        %v1149 = vpack.c.b16 %v1033, %v1029
        %v1150 = vpack.c.b16 %v1034, %v1030
        %v1151 = vpack.c.b16 %v1039, %v1035
        %v1152 = vpack.c.b16 %v1040, %v1036
        %v1153 = vpack.c.b16 %v1041, %v1037
        %v1154 = vpack.c.b16 %v1042, %v1038
        %v1155 = vpack.c.b16 %v1047, %v1043
        %v1156 = vpack.c.b16 %v1048, %v1044
        %v1157 = vpack.c.b16 %v1049, %v1045
        %v1158 = vpack.c.b16 %v1050, %v1046
        %v1159 = vpack.c.b16 %v1055, %v1051
        %v1160 = vpack.c.b16 %v1056, %v1052
        %v1161 = vpack.c.b16 %v1057, %v1053
        %v1162 = vpack.c.b16 %v1058, %v1054
        %v1163 = vpack.c.b16 %v1063, %v1059
        %v1164 = vpack.c.b16 %v1064, %v1060
        %v1165 = vpack.c.b16 %v1065, %v1061
        %v1166 = vpack.c.b16 %v1066, %v1062
        %v1167 = vpack.c.b16 %v1071, %v1067
        %v1168 = vpack.c.b16 %v1072, %v1068
        %v1169 = vpack.c.b16 %v1073, %v1069
        %v1170 = vpack.c.b16 %v1074, %v1070
        %v1171 = vpack.c.b16 %v1079, %v1075
        %v1172 = vpack.c.b16 %v1080, %v1076
        %v1173 = vpack.c.b16 %v1081, %v1077
        %v1174 = vpack.c.b16 %v1082, %v1078
        %v1175 = vpack.c.b16 %v1087, %v1083
        %v1176 = vpack.c.b16 %v1088, %v1084
        %v1177 = vpack.c.b16 %v1089, %v1085
        %v1178 = vpack.c.b16 %v1090, %v1086
        %v1179 = vpack.c.b16 %v1095, %v1091
        %v1180 = vpack.c.b16 %v1096, %v1092
        %v1181 = vpack.c.b16 %v1097, %v1093
        %v1182 = vpack.c.b16 %v1098, %v1094
        %v1183 = vpack.c.b16 %v1103, %v1099
        %v1184 = vpack.c.b16 %v1104, %v1100
        %v1185 = vpack.c.b16 %v1105, %v1101
        %v1186 = vpack.c.b16 %v1106, %v1102
        %v1187 = vpack.c.b16 %v1111, %v1107
        %v1188 = vpack.c.b16 %v1112, %v1108
        %v1189 = vpack.c.b16 %v1113, %v1109
        %v1190 = vpack.c.b16 %v1114, %v1110
        %v1191 = vpack.c.b16 %v1119, %v1115
        %v1192 = vpack.c.b16 %v1120, %v1116
        %v1193 = vpack.c.b16 %v1121, %v1117
        %v1194 = vpack.c.b16 %v1122, %v1118
        %v1195 = vpack.c.b16 %v1127, %v1123
        %v1196 = vpack.c.b16 %v1128, %v1124
        %v1197 = vpack.c.b16 %v1129, %v1125
        %v1198 = vpack.c.b16 %v1130, %v1126
        %v1199 = vpack.c.b16 %v1135, %v1131
        %v1200 = vpack.c.b16 %v1136, %v1132
        %v1201 = vpack.c.b16 %v1137, %v1133
        %v1202 = vpack.c.b16 %v1138, %v1134
        %1267 = vmatpush.bf16.msra.mxu0 %v922
        %1268 = vmatpush.bf16.msra.mxu0 %v921
        %1269 = vmatpush.bf16.msra.mxu0 %v920
        %1270 = vmatpush.bf16.msra.mxu0 %v919
        %1271 = vmatpush.bf16.msra.mxu0 %v918
        %1272 = vmatpush.bf16.msra.mxu0 %v917
        %1273 = vmatpush.bf16.msra.mxu0 %v916
        %1274 = vmatpush.bf16.msra.mxu0 %v915
        %1275 = vmatmul.bf16.gmra.mxu0 %v1139
        %v1276 = vpop.f32.mrf.mxu0
        %v1277 = vadd.f32 0.0, %v1276
        %v1278 = vpop.f32.mrf.mxu0
        %v1279 = vadd.f32 0.0, %v1278
        %1280 = vmatmul.bf16.gmra.mxu0 %v1143
        %v1281 = vpop.f32.mrf.mxu0
        %v1282 = vadd.f32 0.0, %v1281
        %v1283 = vpop.f32.mrf.mxu0
        %v1284 = vadd.f32 0.0, %v1283
        %1285 = vmatmul.bf16.gmra.mxu0 %v1147
        %v1286 = vpop.f32.mrf.mxu0
        %v1287 = vadd.f32 0.0, %v1286
        %v1288 = vpop.f32.mrf.mxu0
        %v1289 = vadd.f32 0.0, %v1288
        %1290 = vmatmul.bf16.gmra.mxu0 %v1151
        %v1291 = vpop.f32.mrf.mxu0
        %v1292 = vadd.f32 0.0, %v1291
        %v1293 = vpop.f32.mrf.mxu0
        %v1294 = vadd.f32 0.0, %v1293
        %1295 = vmatmul.bf16.gmra.mxu0 %v1155
        %v1296 = vpop.f32.mrf.mxu0
        %v1297 = vadd.f32 0.0, %v1296
        %v1298 = vpop.f32.mrf.mxu0
        %v1299 = vadd.f32 0.0, %v1298
        %1300 = vmatmul.bf16.gmra.mxu0 %v1159
        %v1301 = vpop.f32.mrf.mxu0
        %v1302 = vadd.f32 0.0, %v1301
        %v1303 = vpop.f32.mrf.mxu0
        %v1304 = vadd.f32 0.0, %v1303
        %1305 = vmatmul.bf16.gmra.mxu0 %v1163
        %v1306 = vpop.f32.mrf.mxu0
        %v1307 = vadd.f32 0.0, %v1306
        %v1308 = vpop.f32.mrf.mxu0
        %v1309 = vadd.f32 0.0, %v1308
        %1310 = vmatmul.bf16.gmra.mxu0 %v1167
        %v1311 = vpop.f32.mrf.mxu0
        %v1312 = vadd.f32 0.0, %v1311
        %v1313 = vpop.f32.mrf.mxu0
        %v1314 = vadd.f32 0.0, %v1313
        %1315 = vmatmul.bf16.gmra.mxu0 %v1171
        %v1316 = vpop.f32.mrf.mxu0
        %v1317 = vadd.f32 0.0, %v1316
        %v1318 = vpop.f32.mrf.mxu0
        %v1319 = vadd.f32 0.0, %v1318
        %1320 = vmatmul.bf16.gmra.mxu0 %v1175
        %v1321 = vpop.f32.mrf.mxu0
        %v1322 = vadd.f32 0.0, %v1321
        %v1323 = vpop.f32.mrf.mxu0
        %v1324 = vadd.f32 0.0, %v1323
        %1325 = vmatmul.bf16.gmra.mxu0 %v1179
        %v1326 = vpop.f32.mrf.mxu0
        %v1327 = vadd.f32 0.0, %v1326
        %v1328 = vpop.f32.mrf.mxu0
        %v1329 = vadd.f32 0.0, %v1328
        %1330 = vmatmul.bf16.gmra.mxu0 %v1183
        %v1331 = vpop.f32.mrf.mxu0
        %v1332 = vadd.f32 0.0, %v1331
        %v1333 = vpop.f32.mrf.mxu0
        %v1334 = vadd.f32 0.0, %v1333
        %1335 = vmatmul.bf16.gmra.mxu0 %v1187
        %v1336 = vpop.f32.mrf.mxu0
        %v1337 = vadd.f32 0.0, %v1336
        %v1338 = vpop.f32.mrf.mxu0
        %v1339 = vadd.f32 0.0, %v1338
        %1340 = vmatmul.bf16.gmra.mxu0 %v1191
        %v1341 = vpop.f32.mrf.mxu0
        %v1342 = vadd.f32 0.0, %v1341
        %v1343 = vpop.f32.mrf.mxu0
        %v1344 = vadd.f32 0.0, %v1343
        %1345 = vmatmul.bf16.gmra.mxu0 %v1195
        %v1346 = vpop.f32.mrf.mxu0
        %v1347 = vadd.f32 0.0, %v1346
        %v1348 = vpop.f32.mrf.mxu0
        %v1349 = vadd.f32 0.0, %v1348
        %1350 = vmatmul.bf16.gmra.mxu0 %v1199
        %v1351 = vpop.f32.mrf.mxu0
        %v1352 = vadd.f32 0.0, %v1351
        %v1353 = vpop.f32.mrf.mxu0
        %v1354 = vadd.f32 0.0, %v1353
        %1355 = vdwg.mxu0
        %1356 = vmatpush.bf16.msra.mxu0 %v930
        %1357 = vmatpush.bf16.msra.mxu0 %v929
        %1358 = vmatpush.bf16.msra.mxu0 %v928
        %1359 = vmatpush.bf16.msra.mxu0 %v927
        %1360 = vmatpush.bf16.msra.mxu0 %v926
        %1361 = vmatpush.bf16.msra.mxu0 %v925
        %1362 = vmatpush.bf16.msra.mxu0 %v924
        %1363 = vmatpush.bf16.msra.mxu0 %v923
        %1364 = vmatmul.bf16.gmra.mxu0 %v1140
        %v1365 = vpop.f32.mrf.mxu0
        %v1366 = vadd.f32 %v1277, %v1365
        %v1367 = vpop.f32.mrf.mxu0
        %v1368 = vadd.f32 %v1279, %v1367
        %1369 = vmatmul.bf16.gmra.mxu0 %v1144
        %v1370 = vpop.f32.mrf.mxu0
        %v1371 = vadd.f32 %v1282, %v1370
        %v1372 = vpop.f32.mrf.mxu0
        %v1373 = vadd.f32 %v1284, %v1372
        %1374 = vmatmul.bf16.gmra.mxu0 %v1148
        %v1375 = vpop.f32.mrf.mxu0
        %v1376 = vadd.f32 %v1287, %v1375
        %v1377 = vpop.f32.mrf.mxu0
        %v1378 = vadd.f32 %v1289, %v1377
        %1379 = vmatmul.bf16.gmra.mxu0 %v1152
        %v1380 = vpop.f32.mrf.mxu0
        %v1381 = vadd.f32 %v1292, %v1380
        %v1382 = vpop.f32.mrf.mxu0
        %v1383 = vadd.f32 %v1294, %v1382
        %1384 = vmatmul.bf16.gmra.mxu0 %v1156
        %v1385 = vpop.f32.mrf.mxu0
        %v1386 = vadd.f32 %v1297, %v1385
        %v1387 = vpop.f32.mrf.mxu0
        %v1388 = vadd.f32 %v1299, %v1387
        %1389 = vmatmul.bf16.gmra.mxu0 %v1160
        %v1390 = vpop.f32.mrf.mxu0
        %v1391 = vadd.f32 %v1302, %v1390
        %v1392 = vpop.f32.mrf.mxu0
        %v1393 = vadd.f32 %v1304, %v1392
        %1394 = vmatmul.bf16.gmra.mxu0 %v1164
        %v1395 = vpop.f32.mrf.mxu0
        %v1396 = vadd.f32 %v1307, %v1395
        %v1397 = vpop.f32.mrf.mxu0
        %v1398 = vadd.f32 %v1309, %v1397
        %1399 = vmatmul.bf16.gmra.mxu0 %v1168
        %v1400 = vpop.f32.mrf.mxu0
        %v1401 = vadd.f32 %v1312, %v1400
        %v1402 = vpop.f32.mrf.mxu0
        %v1403 = vadd.f32 %v1314, %v1402
        %1404 = vmatmul.bf16.gmra.mxu0 %v1172
        %v1405 = vpop.f32.mrf.mxu0
        %v1406 = vadd.f32 %v1317, %v1405
        %v1407 = vpop.f32.mrf.mxu0
        %v1408 = vadd.f32 %v1319, %v1407
        %1409 = vmatmul.bf16.gmra.mxu0 %v1176
        %v1410 = vpop.f32.mrf.mxu0
        %v1411 = vadd.f32 %v1322, %v1410
        %v1412 = vpop.f32.mrf.mxu0
        %v1413 = vadd.f32 %v1324, %v1412
        %1414 = vmatmul.bf16.gmra.mxu0 %v1180
        %v1415 = vpop.f32.mrf.mxu0
        %v1416 = vadd.f32 %v1327, %v1415
        %v1417 = vpop.f32.mrf.mxu0
        %v1418 = vadd.f32 %v1329, %v1417
        %1419 = vmatmul.bf16.gmra.mxu0 %v1184
        %v1420 = vpop.f32.mrf.mxu0
        %v1421 = vadd.f32 %v1332, %v1420
        %v1422 = vpop.f32.mrf.mxu0
        %v1423 = vadd.f32 %v1334, %v1422
        %1424 = vmatmul.bf16.gmra.mxu0 %v1188
        %v1425 = vpop.f32.mrf.mxu0
        %v1426 = vadd.f32 %v1337, %v1425
        %v1427 = vpop.f32.mrf.mxu0
        %v1428 = vadd.f32 %v1339, %v1427
        %1429 = vmatmul.bf16.gmra.mxu0 %v1192
        %v1430 = vpop.f32.mrf.mxu0
        %v1431 = vadd.f32 %v1342, %v1430
        %v1432 = vpop.f32.mrf.mxu0
        %v1433 = vadd.f32 %v1344, %v1432
        %1434 = vmatmul.bf16.gmra.mxu0 %v1196
        %v1435 = vpop.f32.mrf.mxu0
        %v1436 = vadd.f32 %v1347, %v1435
        %v1437 = vpop.f32.mrf.mxu0
        %v1438 = vadd.f32 %v1349, %v1437
        %1439 = vmatmul.bf16.gmra.mxu0 %v1200
        %v1440 = vpop.f32.mrf.mxu0
        %v1441 = vadd.f32 %v1352, %v1440
        %v1442 = vpop.f32.mrf.mxu0
        %v1443 = vadd.f32 %v1354, %v1442
        %1444 = vdwg.mxu0
        %1445 = vmatpush.bf16.msra.mxu0 %v938
        %1446 = vmatpush.bf16.msra.mxu0 %v937
        %1447 = vmatpush.bf16.msra.mxu0 %v936
        %1448 = vmatpush.bf16.msra.mxu0 %v935
        %1449 = vmatpush.bf16.msra.mxu0 %v934
        %1450 = vmatpush.bf16.msra.mxu0 %v933
        %1451 = vmatpush.bf16.msra.mxu0 %v932
        %1452 = vmatpush.bf16.msra.mxu0 %v931
        %1453 = vmatmul.bf16.gmra.mxu0 %v1141
        %v1454 = vpop.f32.mrf.mxu0
        %v1455 = vadd.f32 %v1366, %v1454
        %v1456 = vpop.f32.mrf.mxu0
        %v1457 = vadd.f32 %v1368, %v1456
        %1458 = vmatmul.bf16.gmra.mxu0 %v1145
        %v1459 = vpop.f32.mrf.mxu0
        %v1460 = vadd.f32 %v1371, %v1459
        %v1461 = vpop.f32.mrf.mxu0
        %v1462 = vadd.f32 %v1373, %v1461
        %1463 = vmatmul.bf16.gmra.mxu0 %v1149
        %v1464 = vpop.f32.mrf.mxu0
        %v1465 = vadd.f32 %v1376, %v1464
        %v1466 = vpop.f32.mrf.mxu0
        %v1467 = vadd.f32 %v1378, %v1466
        %1468 = vmatmul.bf16.gmra.mxu0 %v1153
        %v1469 = vpop.f32.mrf.mxu0
        %v1470 = vadd.f32 %v1381, %v1469
        %v1471 = vpop.f32.mrf.mxu0
        %v1472 = vadd.f32 %v1383, %v1471
        %1473 = vmatmul.bf16.gmra.mxu0 %v1157
        %v1474 = vpop.f32.mrf.mxu0
        %v1475 = vadd.f32 %v1386, %v1474
        %v1476 = vpop.f32.mrf.mxu0
        %v1477 = vadd.f32 %v1388, %v1476
        %1478 = vmatmul.bf16.gmra.mxu0 %v1161
        %v1479 = vpop.f32.mrf.mxu0
        %v1480 = vadd.f32 %v1391, %v1479
        %v1481 = vpop.f32.mrf.mxu0
        %v1482 = vadd.f32 %v1393, %v1481
        %1483 = vmatmul.bf16.gmra.mxu0 %v1165
        %v1484 = vpop.f32.mrf.mxu0
        %v1485 = vadd.f32 %v1396, %v1484
        %v1486 = vpop.f32.mrf.mxu0
        %v1487 = vadd.f32 %v1398, %v1486
        %1488 = vmatmul.bf16.gmra.mxu0 %v1169
        %v1489 = vpop.f32.mrf.mxu0
        %v1490 = vadd.f32 %v1401, %v1489
        %v1491 = vpop.f32.mrf.mxu0
        %v1492 = vadd.f32 %v1403, %v1491
        %1493 = vmatmul.bf16.gmra.mxu0 %v1173
        %v1494 = vpop.f32.mrf.mxu0
        %v1495 = vadd.f32 %v1406, %v1494
        %v1496 = vpop.f32.mrf.mxu0
        %v1497 = vadd.f32 %v1408, %v1496
        %1498 = vmatmul.bf16.gmra.mxu0 %v1177
        %v1499 = vpop.f32.mrf.mxu0
        %v1500 = vadd.f32 %v1411, %v1499
        %v1501 = vpop.f32.mrf.mxu0
        %v1502 = vadd.f32 %v1413, %v1501
        %1503 = vmatmul.bf16.gmra.mxu0 %v1181
        %v1504 = vpop.f32.mrf.mxu0
        %v1505 = vadd.f32 %v1416, %v1504
        %v1506 = vpop.f32.mrf.mxu0
        %v1507 = vadd.f32 %v1418, %v1506
        %1508 = vmatmul.bf16.gmra.mxu0 %v1185
        %v1509 = vpop.f32.mrf.mxu0
        %v1510 = vadd.f32 %v1421, %v1509
        %v1511 = vpop.f32.mrf.mxu0
        %v1512 = vadd.f32 %v1423, %v1511
        %1513 = vmatmul.bf16.gmra.mxu0 %v1189
        %v1514 = vpop.f32.mrf.mxu0
        %v1515 = vadd.f32 %v1426, %v1514
        %v1516 = vpop.f32.mrf.mxu0
        %v1517 = vadd.f32 %v1428, %v1516
        %1518 = vmatmul.bf16.gmra.mxu0 %v1193
        %v1519 = vpop.f32.mrf.mxu0
        %v1520 = vadd.f32 %v1431, %v1519
        %v1521 = vpop.f32.mrf.mxu0
        %v1522 = vadd.f32 %v1433, %v1521
        %1523 = vmatmul.bf16.gmra.mxu0 %v1197
        %v1524 = vpop.f32.mrf.mxu0
        %v1525 = vadd.f32 %v1436, %v1524
        %v1526 = vpop.f32.mrf.mxu0
        %v1527 = vadd.f32 %v1438, %v1526
        %1528 = vmatmul.bf16.gmra.mxu0 %v1201
        %v1529 = vpop.f32.mrf.mxu0
        %v1530 = vadd.f32 %v1441, %v1529
        %v1531 = vpop.f32.mrf.mxu0
        %v1532 = vadd.f32 %v1443, %v1531
        %1533 = vdwg.mxu0
        %1534 = vmatpush.bf16.msra.mxu0 %v946
        %1535 = vmatpush.bf16.msra.mxu0 %v945
        %1536 = vmatpush.bf16.msra.mxu0 %v944
        %1537 = vmatpush.bf16.msra.mxu0 %v943
        %1538 = vmatpush.bf16.msra.mxu0 %v942
        %1539 = vmatpush.bf16.msra.mxu0 %v941
        %1540 = vmatpush.bf16.msra.mxu0 %v940
        %1541 = vmatpush.bf16.msra.mxu0 %v939
        %1542 = vmatmul.bf16.gmra.mxu0 %v1142
        %v1543 = vpop.f32.mrf.mxu0
        %v1544 = vadd.f32 %v1455, %v1543
        %v1545 = vpop.f32.mrf.mxu0
        %v1546 = vadd.f32 %v1457, %v1545
        %1547 = vmatmul.bf16.gmra.mxu0 %v1146
        %v1548 = vpop.f32.mrf.mxu0
        %v1549 = vadd.f32 %v1460, %v1548
        %v1550 = vpop.f32.mrf.mxu0
        %v1551 = vadd.f32 %v1462, %v1550
        %1552 = vmatmul.bf16.gmra.mxu0 %v1150
        %v1553 = vpop.f32.mrf.mxu0
        %v1554 = vadd.f32 %v1465, %v1553
        %v1555 = vpop.f32.mrf.mxu0
        %v1556 = vadd.f32 %v1467, %v1555
        %1557 = vmatmul.bf16.gmra.mxu0 %v1154
        %v1558 = vpop.f32.mrf.mxu0
        %v1559 = vadd.f32 %v1470, %v1558
        %v1560 = vpop.f32.mrf.mxu0
        %v1561 = vadd.f32 %v1472, %v1560
        %1562 = vmatmul.bf16.gmra.mxu0 %v1158
        %v1563 = vpop.f32.mrf.mxu0
        %v1564 = vadd.f32 %v1475, %v1563
        %v1565 = vpop.f32.mrf.mxu0
        %v1566 = vadd.f32 %v1477, %v1565
        %1567 = vmatmul.bf16.gmra.mxu0 %v1162
        %v1568 = vpop.f32.mrf.mxu0
        %v1569 = vadd.f32 %v1480, %v1568
        %v1570 = vpop.f32.mrf.mxu0
        %v1571 = vadd.f32 %v1482, %v1570
        %1572 = vmatmul.bf16.gmra.mxu0 %v1166
        %v1573 = vpop.f32.mrf.mxu0
        %v1574 = vadd.f32 %v1485, %v1573
        %v1575 = vpop.f32.mrf.mxu0
        %v1576 = vadd.f32 %v1487, %v1575
        %1577 = vmatmul.bf16.gmra.mxu0 %v1170
        %v1578 = vpop.f32.mrf.mxu0
        %v1579 = vadd.f32 %v1490, %v1578
        %v1580 = vpop.f32.mrf.mxu0
        %v1581 = vadd.f32 %v1492, %v1580
        %1582 = vmatmul.bf16.gmra.mxu0 %v1174
        %v1583 = vpop.f32.mrf.mxu0
        %v1584 = vadd.f32 %v1495, %v1583
        %v1585 = vpop.f32.mrf.mxu0
        %v1586 = vadd.f32 %v1497, %v1585
        %1587 = vmatmul.bf16.gmra.mxu0 %v1178
        %v1588 = vpop.f32.mrf.mxu0
        %v1589 = vadd.f32 %v1500, %v1588
        %v1590 = vpop.f32.mrf.mxu0
        %v1591 = vadd.f32 %v1502, %v1590
        %1592 = vmatmul.bf16.gmra.mxu0 %v1182
        %v1593 = vpop.f32.mrf.mxu0
        %v1594 = vadd.f32 %v1505, %v1593
        %v1595 = vpop.f32.mrf.mxu0
        %v1596 = vadd.f32 %v1507, %v1595
        %1597 = vmatmul.bf16.gmra.mxu0 %v1186
        %v1598 = vpop.f32.mrf.mxu0
        %v1599 = vadd.f32 %v1510, %v1598
        %v1600 = vpop.f32.mrf.mxu0
        %v1601 = vadd.f32 %v1512, %v1600
        %1602 = vmatmul.bf16.gmra.mxu0 %v1190
        %v1603 = vpop.f32.mrf.mxu0
        %v1604 = vadd.f32 %v1515, %v1603
        %v1605 = vpop.f32.mrf.mxu0
        %v1606 = vadd.f32 %v1517, %v1605
        %1607 = vmatmul.bf16.gmra.mxu0 %v1194
        %v1608 = vpop.f32.mrf.mxu0
        %v1609 = vadd.f32 %v1520, %v1608
        %v1610 = vpop.f32.mrf.mxu0
        %v1611 = vadd.f32 %v1522, %v1610
        %1612 = vmatmul.bf16.gmra.mxu0 %v1198
        %v1613 = vpop.f32.mrf.mxu0
        %v1614 = vadd.f32 %v1525, %v1613
        %v1615 = vpop.f32.mrf.mxu0
        %v1616 = vadd.f32 %v1527, %v1615
        %1617 = vmatmul.bf16.gmra.mxu0 %v1202
        %v1618 = vpop.f32.mrf.mxu0
        %v1619 = vadd.f32 %v1530, %v1618
        %v1620 = vpop.f32.mrf.mxu0
        %v1621 = vadd.f32 %v1532, %v1620
        %1622 = vdwg.mxu0
        %v1623 = vadd.f32 %v819, %v1544
        %v1624 = vadd.f32 %v820, %v1546
        %v1625 = vadd.f32 %v821, %v1549
        %v1626 = vadd.f32 %v822, %v1551
        %v1627 = vadd.f32 %v823, %v1554
        %v1628 = vadd.f32 %v824, %v1556
        %v1629 = vadd.f32 %v825, %v1559
        %v1630 = vadd.f32 %v826, %v1561
        %v1631 = vadd.f32 %v827, %v1564
        %v1632 = vadd.f32 %v828, %v1566
        %v1633 = vadd.f32 %v829, %v1569
        %v1634 = vadd.f32 %v830, %v1571
        %v1635 = vadd.f32 %v831, %v1574
        %v1636 = vadd.f32 %v832, %v1576
        %v1637 = vadd.f32 %v833, %v1579
        %v1638 = vadd.f32 %v834, %v1581
        %v1639 = vadd.f32 %v835, %v1584
        %v1640 = vadd.f32 %v836, %v1586
        %v1641 = vadd.f32 %v837, %v1589
        %v1642 = vadd.f32 %v838, %v1591
        %v1643 = vadd.f32 %v839, %v1594
        %v1644 = vadd.f32 %v840, %v1596
        %v1645 = vadd.f32 %v841, %v1599
        %v1646 = vadd.f32 %v842, %v1601
        %v1647 = vadd.f32 %v843, %v1604
        %v1648 = vadd.f32 %v844, %v1606
        %v1649 = vadd.f32 %v845, %v1609
        %v1650 = vadd.f32 %v846, %v1611
        %v1651 = vadd.f32 %v847, %v1614
        %v1652 = vadd.f32 %v848, %v1616
        %v1653 = vadd.f32 %v849, %v1619
        %v1654 = vadd.f32 %v850, %v1621
        %1655 = vst [vmem:[%s250] sm:$0xff] %v1623
        %1656 = vst [vmem:[%s250 + $0x8] sm:$0xff] %v1624
        %1657 = vst [vmem:[%s250 + $0x10] sm:$0xff] %v1625
        %1658 = vst [vmem:[%s250 + $0x18] sm:$0xff] %v1626
        %1659 = vst [vmem:[%s250 + $0x20] sm:$0xff] %v1627
        %1660 = vst [vmem:[%s250 + $0x28] sm:$0xff] %v1628
        %1661 = vst [vmem:[%s250 + $0x30] sm:$0xff] %v1629
        %1662 = vst [vmem:[%s250 + $0x38] sm:$0xff] %v1630
        %1663 = vst [vmem:[%s250 + $0x40] sm:$0xff] %v1631
        %1664 = vst [vmem:[%s250 + $0x48] sm:$0xff] %v1632
        %1665 = vst [vmem:[%s250 + $0x50] sm:$0xff] %v1633
        %1666 = vst [vmem:[%s250 + $0x58] sm:$0xff] %v1634
        %1667 = vst [vmem:[%s250 + $0x60] sm:$0xff] %v1635
        %1668 = vst [vmem:[%s250 + $0x68] sm:$0xff] %v1636
        %1669 = vst [vmem:[%s250 + $0x70] sm:$0xff] %v1637
        %1670 = vst [vmem:[%s250 + $0x78] sm:$0xff] %v1638
        %1671 = vst [vmem:[%s250 + $0x80] sm:$0xff] %v1639
        %1672 = vst [vmem:[%s250 + $0x88] sm:$0xff] %v1640
        %1673 = vst [vmem:[%s250 + $0x90] sm:$0xff] %v1641
        %1674 = vst [vmem:[%s250 + $0x98] sm:$0xff] %v1642
        %1675 = vst [vmem:[%s250 + $0xa0] sm:$0xff] %v1643
        %1676 = vst [vmem:[%s250 + $0xa8] sm:$0xff] %v1644
        %1677 = vst [vmem:[%s250 + $0xb0] sm:$0xff] %v1645
        %1678 = vst [vmem:[%s250 + $0xb8] sm:$0xff] %v1646
        %1679 = vst [vmem:[%s250 + $0xc0] sm:$0xff] %v1647
        %1680 = vst [vmem:[%s250 + $0xc8] sm:$0xff] %v1648
        %1681 = vst [vmem:[%s250 + $0xd0] sm:$0xff] %v1649
        %1682 = vst [vmem:[%s250 + $0xd8] sm:$0xff] %v1650
        %1683 = vst [vmem:[%s250 + $0xe0] sm:$0xff] %v1651
        %1684 = vst [vmem:[%s250 + $0xe8] sm:$0xff] %v1652
        %1685 = vst [vmem:[%s250 + $0xf0] sm:$0xff] %v1653
        %1686 = vst [vmem:[%s250 + $0xf8] sm:$0xff] %v1654
        // Predicated region
        $region45: #{tpu_custom_call.1} parent=35 // pred_check
          %p1687 = pneg %p261
        $region46: #{tpu_custom_call.1} parent=35 // pred_check_branch
          %1689 = sbr.rel (%p1687) target = $region48
        $region47: #{tpu_custom_call.1} parent=35 // pred_region
          %v1690 = vld [vmem:[%s250] sm:$0xff]
          %v1691 = vld [vmem:[%s250 + $0x8] sm:$0xff]
          %v1692 = vld [vmem:[%s250 + $0x10] sm:$0xff]
          %v1693 = vld [vmem:[%s250 + $0x18] sm:$0xff]
          %v1694 = vld [vmem:[%s250 + $0x20] sm:$0xff]
          %v1695 = vld [vmem:[%s250 + $0x28] sm:$0xff]
          %v1696 = vld [vmem:[%s250 + $0x30] sm:$0xff]
          %v1697 = vld [vmem:[%s250 + $0x38] sm:$0xff]
          %v1698 = vld [vmem:[%s250 + $0x40] sm:$0xff]
          %v1699 = vld [vmem:[%s250 + $0x48] sm:$0xff]
          %v1700 = vld [vmem:[%s250 + $0x50] sm:$0xff]
          %v1701 = vld [vmem:[%s250 + $0x58] sm:$0xff]
          %v1702 = vld [vmem:[%s250 + $0x60] sm:$0xff]
          %v1703 = vld [vmem:[%s250 + $0x68] sm:$0xff]
          %v1704 = vld [vmem:[%s250 + $0x70] sm:$0xff]
          %v1705 = vld [vmem:[%s250 + $0x78] sm:$0xff]
          %v1706 = vld [vmem:[%s250 + $0x80] sm:$0xff]
          %v1707 = vld [vmem:[%s250 + $0x88] sm:$0xff]
          %v1708 = vld [vmem:[%s250 + $0x90] sm:$0xff]
          %v1709 = vld [vmem:[%s250 + $0x98] sm:$0xff]
          %v1710 = vld [vmem:[%s250 + $0xa0] sm:$0xff]
          %v1711 = vld [vmem:[%s250 + $0xa8] sm:$0xff]
          %v1712 = vld [vmem:[%s250 + $0xb0] sm:$0xff]
          %v1713 = vld [vmem:[%s250 + $0xb8] sm:$0xff]
          %v1714 = vld [vmem:[%s250 + $0xc0] sm:$0xff]
          %v1715 = vld [vmem:[%s250 + $0xc8] sm:$0xff]
          %v1716 = vld [vmem:[%s250 + $0xd0] sm:$0xff]
          %v1717 = vld [vmem:[%s250 + $0xd8] sm:$0xff]
          %v1718 = vld [vmem:[%s250 + $0xe0] sm:$0xff]
          %v1719 = vld [vmem:[%s250 + $0xe8] sm:$0xff]
          %v1720 = vld [vmem:[%s250 + $0xf0] sm:$0xff]
          %v1721 = vld [vmem:[%s250 + $0xf8] sm:$0xff]
          %v1722 = vld [vmem:[%s3] sm:$0x1]
          %v1724 = vperm.slane %v1722, 0
          %v1726 = vadd.f32 %v1690, %v1724
          %v1727 = vadd.f32 %v1691, %v1724
          %v1728 = vadd.f32 %v1692, %v1724
          %v1729 = vadd.f32 %v1693, %v1724
          %v1730 = vadd.f32 %v1694, %v1724
          %v1731 = vadd.f32 %v1695, %v1724
          %v1732 = vadd.f32 %v1696, %v1724
          %v1733 = vadd.f32 %v1697, %v1724
          %v1734 = vadd.f32 %v1698, %v1724
          %v1735 = vadd.f32 %v1699, %v1724
          %v1736 = vadd.f32 %v1700, %v1724
          %v1737 = vadd.f32 %v1701, %v1724
          %v1738 = vadd.f32 %v1702, %v1724
          %v1739 = vadd.f32 %v1703, %v1724
          %v1740 = vadd.f32 %v1704, %v1724
          %v1741 = vadd.f32 %v1705, %v1724
          %v1742 = vadd.f32 %v1706, %v1724
          %v1743 = vadd.f32 %v1707, %v1724
          %v1744 = vadd.f32 %v1708, %v1724
          %v1745 = vadd.f32 %v1709, %v1724
          %v1746 = vadd.f32 %v1710, %v1724
          %v1747 = vadd.f32 %v1711, %v1724
          %v1748 = vadd.f32 %v1712, %v1724
          %v1749 = vadd.f32 %v1713, %v1724
          %v1750 = vadd.f32 %v1714, %v1724
          %v1751 = vadd.f32 %v1715, %v1724
          %v1752 = vadd.f32 %v1716, %v1724
          %v1753 = vadd.f32 %v1717, %v1724
          %v1754 = vadd.f32 %v1718, %v1724
          %v1755 = vadd.f32 %v1719, %v1724
          %v1756 = vadd.f32 %v1720, %v1724
          %v1757 = vadd.f32 %v1721, %v1724
          %1758 = vst [vmem:[%s250] sm:$0xff] %v1726
          %1759 = vst [vmem:[%s250 + $0x8] sm:$0xff] %v1727
          %1760 = vst [vmem:[%s250 + $0x10] sm:$0xff] %v1728
          %1761 = vst [vmem:[%s250 + $0x18] sm:$0xff] %v1729
          %1762 = vst [vmem:[%s250 + $0x20] sm:$0xff] %v1730
          %1763 = vst [vmem:[%s250 + $0x28] sm:$0xff] %v1731
          %1764 = vst [vmem:[%s250 + $0x30] sm:$0xff] %v1732
          %1765 = vst [vmem:[%s250 + $0x38] sm:$0xff] %v1733
          %1766 = vst [vmem:[%s250 + $0x40] sm:$0xff] %v1734
          %1767 = vst [vmem:[%s250 + $0x48] sm:$0xff] %v1735
          %1768 = vst [vmem:[%s250 + $0x50] sm:$0xff] %v1736
          %1769 = vst [vmem:[%s250 + $0x58] sm:$0xff] %v1737
          %1770 = vst [vmem:[%s250 + $0x60] sm:$0xff] %v1738
          %1771 = vst [vmem:[%s250 + $0x68] sm:$0xff] %v1739
          %1772 = vst [vmem:[%s250 + $0x70] sm:$0xff] %v1740
          %1773 = vst [vmem:[%s250 + $0x78] sm:$0xff] %v1741
          %1774 = vst [vmem:[%s250 + $0x80] sm:$0xff] %v1742
          %1775 = vst [vmem:[%s250 + $0x88] sm:$0xff] %v1743
          %1776 = vst [vmem:[%s250 + $0x90] sm:$0xff] %v1744
          %1777 = vst [vmem:[%s250 + $0x98] sm:$0xff] %v1745
          %1778 = vst [vmem:[%s250 + $0xa0] sm:$0xff] %v1746
          %1779 = vst [vmem:[%s250 + $0xa8] sm:$0xff] %v1747
          %1780 = vst [vmem:[%s250 + $0xb0] sm:$0xff] %v1748
          %1781 = vst [vmem:[%s250 + $0xb8] sm:$0xff] %v1749
          %1782 = vst [vmem:[%s250 + $0xc0] sm:$0xff] %v1750
          %1783 = vst [vmem:[%s250 + $0xc8] sm:$0xff] %v1751
          %1784 = vst [vmem:[%s250 + $0xd0] sm:$0xff] %v1752
          %1785 = vst [vmem:[%s250 + $0xd8] sm:$0xff] %v1753
          %1786 = vst [vmem:[%s250 + $0xe0] sm:$0xff] %v1754
          %1787 = vst [vmem:[%s250 + $0xe8] sm:$0xff] %v1755
          %1788 = vst [vmem:[%s250 + $0xf0] sm:$0xff] %v1756
          %1789 = vst [vmem:[%s250 + $0xf8] sm:$0xff] %v1757
        $region48: #{tpu_custom_call.1} parent=35 // pred_fallthru
          _
        %s1790 = sand.u32 %s137, 1
        %s1791 = scalar_lea.sflag [#allocation4], %s1790
        %s1792 = sand.u32 %s137, 1
        %s1793 = smul.addr %s1792, 256
        %s1794 = scalar_lea.vmem [#allocation5], %s1793
        // Predicated region
        $region49: #{tpu_custom_call.1} parent=35 // pred_check
          %p1795 = pneg %p147
        $region50: #{tpu_custom_call.1} parent=35 // pred_check_branch
          %1797 = sbr.rel (%p1795) target = $region52
        $region51: #{tpu_custom_call.1} parent=35 // pred_region
          %s1798 = smul.u32 32, %s25
          %1800 = vsyncadd %s1791, 0
          %s1801 = smul.addr %s1798, 8
          %s1802 = scalar_lea.hbm %s4, %s1801
          %s1803 = sshll.u32 %s1794, 4
          %s1804 = int_to_ptr.vmem [resolvable:$true] %s1803
          %s1805 = sshll.u32 %s1802, 4
          %s1806 = int_to_ptr.hbm [resolvable:$true] %s1805
          %1811 = dma.vmem_to_hbm [thread:$0]  %s1804, 4096, %s1806, %s1791, 128, 128, 8
        $region52: #{tpu_custom_call.1} parent=35 // pred_fallthru
          _
      $region36: #{tpu_custom_call.1} parent=5 // pred_fallthru
        _
      %p1812 = scmp.le.s32.totalorder 2, %s16
      // Predicated region
      $region53: #{tpu_custom_call.1} parent=5 // pred_check
        %p1813 = pneg %p1812
      $region54: #{tpu_custom_call.1} parent=5 // pred_check_branch
        %1815 = sbr.rel (%p1813) target = $region56
      $region55: #{tpu_custom_call.1} parent=5 // pred_region
        %s1816 = ssub.s32 %s16, 2
        // Predicated region
        $region57: #{tpu_custom_call.1} parent=55 // pred_check
          %p1817 = pneg %p153
        $region58: #{tpu_custom_call.1} parent=55 // pred_check_branch
          %1819 = sbr.rel (%p1817) target = $region60
        $region59: #{tpu_custom_call.1} parent=55 // pred_region
          %s1820 = sand.u32 %s138, 1
          %s1821 = scalar_lea.sflag [#allocation4], %s1820
          %s1822 = sand.u32 %s138, 1
          %s1823 = smul.addr %s1822, 256
          %s1824 = scalar_lea.vmem [#allocation5], %s1823
          %1826 = dma.done %s1821, 4096
        $region60: #{tpu_custom_call.1} parent=55 // pred_fallthru
          _
      $region56: #{tpu_custom_call.1} parent=5 // pred_fallthru
        _
    $region6: #{tpu_custom_call.1} parent=1 // loop_footer
      %s20 = sadd.s32 1, %s16
    $region7: #{tpu_custom_call.1} parent=1 // loop_footer_branch
      %15 = sbr.rel target = $region3
    $region8: #{tpu_custom_call.1} parent=1 // loop_exit
      _
    %1827 = vsyncpa [#allocation3], 1
    %s1828 = scalar_lea.sflag [#allocation3], 1
    %1829 = vsyncpa %s1828, 1
    %1830 = vsyncpa [#allocation4], 1
    %s1831 = scalar_lea.sflag [#allocation4], 1
    %1832 = vsyncpa %s1831, 1

</llo_original>
